<compile_context>
chip_gen: v7x
topology: tpu7x:2x2x1
jax: 0.10.0
libtpu: 0.0.40
codegen_flags: <defaults>
</compile_context>

<pallas_src>
import functools

import jax
import jax.numpy as jnp
from jax import lax
from jax.experimental import pallas as pl
from jax.experimental.pallas import tpu as pltpu


# ----------------------------- Pallas kernel -------------------------------
def _oab_kernel(qx_ref, kx_ref, vx_ref, mask_ref,
                wq1_ref, bq1_ref, wq2_ref, bq2_ref,
                wk1_ref, bk1_ref, wk2_ref, bk2_ref,
                wv_ref, bv_ref, wo_ref, bo_ref,
                wbc_ref, wbq_ref, bb_ref,
                out_ref, k_scr, v_scr, *, compute_dtype):
    cdt = compute_dtype

    def proj(x, w_ref, b_ref):        # 1x1 conv + folded BN + ReLU
        y = jnp.dot(x.astype(cdt), w_ref[...],
                    preferred_element_type=jnp.float32) + b_ref[...]
        return jnp.maximum(y, 0.0)

    # ---- key/value projections: compute once per batch, reuse for all q tiles
    @pl.when(pl.program_id(1) == 0)
    def _():
        kx = kx_ref[0]                                              # (Nk, Cin)
        vx = vx_ref[0]                                              # (Nk, Cin)
        k = proj(proj(kx, wk1_ref, bk1_ref), wk2_ref, bk2_ref)      # (Nk, Cm)
        k_scr[...] = k.astype(k_scr.dtype)
        v = proj(vx, wv_ref, bv_ref)                                # (Nk, Cm)
        v_scr[...] = v.astype(v_scr.dtype)

    qx = qx_ref[0]                                                  # (TQ, Cin)
    m = mask_ref[0]                                                 # (1, Nk)

    # query projection; the channels**-0.5 scale is pre-folded into wq2/bq2
    q = proj(proj(qx, wq1_ref, bq1_ref), wq2_ref, bq2_ref)          # (TQ, Cm)

    # sim = q @ k.T without materializing the transpose (MXU consumes it)
    sim = lax.dot_general(q.astype(cdt), k_scr[...],
                          dimension_numbers=(((1,), (1,)), ((), ())),
                          preferred_element_type=jnp.float32)       # (TQ, Nk)
    # single VPU select instead of 2 muls + 1 add; exactly matches
    # sim*m + (-1e7)*(1-m) for a {0,1} mask (incl. fully-masked rows).
    sim = jnp.where(m > 0.0, sim, -10000000.0)

    # softmax in f32 (v5e-safe); normalize with reciprocal + multiply.
    sim = sim - jnp.max(sim, axis=-1, keepdims=True)
    p = jnp.exp(sim)
    # exact reciprocal keeps the tight tolerance check; approx=True would move
    # it fully to the EUP slot at ~2^-12 relative error.
    inv = pl.reciprocal(jnp.sum(p, axis=-1, keepdims=True), approx=False)
    p = p * inv

    ctx = jnp.dot(p.astype(cdt), v_scr[...],
                  preferred_element_type=jnp.float32)               # (TQ, Cm)
    ctx = proj(ctx, wo_ref, bo_ref)                                 # (TQ, Cin)

    # bottleneck over concat([context, query_feats]) as a split-weight matmul
    out = (jnp.dot(ctx.astype(cdt), wbc_ref[...],
                   preferred_element_type=jnp.float32)
           + jnp.dot(qx.astype(cdt), wbq_ref[...],
                     preferred_element_type=jnp.float32)
           + bb_ref[...])
    out_ref[0] = jnp.maximum(out, 0.0).astype(out_ref.dtype)


# ----------------------------- parameter glue -------------------------------
def _fold_conv_bn(w_conv, gamma, beta, mean, var, eps=1e-5):
    """Fold Conv2d(1x1, bias=False) + eval-mode BatchNorm2d into (W_eff, b_eff).

    w_conv: (Cout, Cin) — the [:, :, 0, 0] slice of the PyTorch conv weight.
    Returns W_eff (Cin, Cout), b_eff (1, Cout) so y = relu(x @ W_eff + b_eff).
    """
    scale = gamma / jnp.sqrt(var + eps)
    w_eff = (w_conv * scale[:, None]).T
    b_eff = (beta - mean * scale)[None, :]
    return w_eff.astype(jnp.float32), b_eff.astype(jnp.float32)


def init_params(key, in_channels, channels, out_channels):
    keys = list(jax.random.split(key, 40))
    it = iter(keys)

    def conv_bn(cin, cout):
        w = jax.random.normal(next(it), (cout, cin), jnp.float32) / jnp.sqrt(cin)
        gamma = jax.random.uniform(next(it), (cout,), jnp.float32, 0.5, 1.5)
        beta = 0.1 * jax.random.normal(next(it), (cout,), jnp.float32)
        mean = 0.1 * jax.random.normal(next(it), (cout,), jnp.float32)
        var = jax.random.uniform(next(it), (cout,), jnp.float32, 0.5, 1.5)
        return _fold_conv_bn(w, gamma, beta, mean, var)

    p = {}
    p['wq1'], p['bq1'] = conv_bn(in_channels, channels)
    p['wq2'], p['bq2'] = conv_bn(channels, channels)
    p['wk1'], p['bk1'] = conv_bn(in_channels, channels)
    p['wk2'], p['bk2'] = conv_bn(channels, channels)
    p['wv'], p['bv'] = conv_bn(in_channels, channels)        # with_out=True -> value -> channels
    p['wo'], p['bo'] = conv_bn(channels, in_channels)        # out_project -> in_channels
    wb, bb = conv_bn(2 * in_channels, out_channels)          # bottleneck on concat
    p['wbc'] = wb[:in_channels]                              # context half
    p['wbq'] = wb[in_channels:]                              # query half
    p['bb'] = bb
    return p


_PARAM_ORDER = ('wq1', 'bq1', 'wq2', 'bq2', 'wk1', 'bk1', 'wk2', 'bk2',
                'wv', 'bv', 'wo', 'bo', 'wbc', 'wbq', 'bb')


def _prepare_params(params, channels, compute_dtype=jnp.bfloat16):
    """Fold the channels**-0.5 softmax scale into wq2/bq2 (exact: ReLU and the
    subsequent matmuls commute with a positive scale), and cast weights to the
    MXU compute dtype (bf16). Biases stay f32 (added after f32 accumulation)."""
    s = channels ** -0.5
    prep = {}
    for name in _PARAM_ORDER:
        p = params[name]
        if name == 'wq2':
            p = p * s
        elif name == 'bq2':
            p = p * s
        if name.startswith('w'):
            prep[name] = p.astype(compute_dtype)
        else:
            prep[name] = p.astype(jnp.float32)
    return prep


def _pick_tile(n, desired):
    """Largest tile <= desired that divides n and is sublane-aligned (mult of 8)."""
    desired = max(1, min(desired, n))
    for t in range(desired, 0, -1):
        if n % t == 0 and (t % 8 == 0 or t == n):
            return t
    return n


# ----------------------------- wrapper --------------------------------------
def object_attention_block(query_nchw, key_nchw, value_nchw, key_mask_nchw,
                           params, channels, tq=512,
                           compute_dtype=jnp.bfloat16):
    B, Cin, H, W = query_nchw.shape
    _, _, Hk, Wk = key_nchw.shape
    Nq, Nk = H * W, Hk * Wk
    Cm = channels
    Cout = params['bb'].shape[-1]

    tq = _pick_tile(Nq, tq)
    nqt = Nq // tq

    # NCHW -> (B, N, C); activations shipped in bf16 (only used as MXU operands)
    qx = jnp.transpose(query_nchw.reshape(B, Cin, Nq), (0, 2, 1)).astype(compute_dtype)
    kx = jnp.transpose(key_nchw.reshape(B, Cin, Nk), (0, 2, 1)).astype(compute_dtype)
    vx = jnp.transpose(value_nchw.reshape(B, Cin, Nk), (0, 2, 1)).astype(compute_dtype)
    mask = key_mask_nchw.reshape(B, 1, Nk).astype(jnp.float32)

    prep = _prepare_params(params, channels, compute_dtype)
    param_list = [prep[name] for name in _PARAM_ORDER]

    data_specs = [
        pl.BlockSpec((1, tq, Cin), lambda b, j: (b, j, 0)),   # query tile
        pl.BlockSpec((1, Nk, Cin), lambda b, j: (b, 0, 0)),   # key  (re-DMA only when b changes)
        pl.BlockSpec((1, Nk, Cin), lambda b, j: (b, 0, 0)),   # value
        pl.BlockSpec((1, 1, Nk), lambda b, j: (b, 0, 0)),     # mask
    ]
    # Weights/biases: constant index_map -> DMA'd only once by the pipeline.
    param_specs = [pl.BlockSpec(p.shape, lambda b, j: (0, 0)) for p in param_list]

    out = pl.pallas_call(
        functools.partial(_oab_kernel, compute_dtype=compute_dtype),
        out_shape=jax.ShapeDtypeStruct((B, Nq, Cout), jnp.float32),
        grid_spec=pltpu.PrefetchScalarGridSpec(
            num_scalar_prefetch=0,
            grid=(B, nqt),
            in_specs=data_specs + param_specs,
            out_specs=pl.BlockSpec((1, tq, Cout), lambda b, j: (b, j, 0)),
            scratch_shapes=[pltpu.VMEM((Nk, Cm), compute_dtype),   # projected K
                            pltpu.VMEM((Nk, Cm), compute_dtype)],  # projected V
        ),
        compiler_params=pltpu.CompilerParams(
            # Nq axis must be "arbitrary": the K/V scratch is initialized at
            # j==0 and carried across query tiles of the same batch.
            dimension_semantics=("parallel", "arbitrary"),
            vmem_limit_bytes=48 * 1024 * 1024),
    )(qx, kx, vx, mask, *param_list)

    # (B, Nq, Cout) -> NCHW
    return jnp.transpose(out, (0, 2, 1)).reshape(B, Cout, H, W)


# ----------------------------- pure-JAX reference ---------------------------
def _reference(qx, kx, vx, mask, prep, compute_dtype=jnp.bfloat16):
    """Mirrors the module's math with the same bf16-operand / f32-accumulate
    numerics as the kernel (scale folded into wq2/bq2 is exact)."""
    cdt = compute_dtype

    def proj(x, w, b):
        y = jnp.dot(x.astype(cdt), w, preferred_element_type=jnp.float32) + b
        return jnp.maximum(y, 0.0)

    def single(qx, kx, vx, m):
        q = proj(proj(qx, prep['wq1'], prep['bq1']), prep['wq2'], prep['bq2'])
        k = proj(proj(kx, prep['wk1'], prep['bk1']), prep['wk2'], prep['bk2'])
        v = proj(vx, prep['wv'], prep['bv'])
        sim = lax.dot_general(q.astype(cdt), k.astype(cdt),
                              dimension_numbers=(((1,), (1,)), ((), ())),
                              preferred_element_type=jnp.float32)
        sim = sim * m + (-10000000.0) * (1.0 - m)        # original mask formula
        sim = sim - jnp.max(sim, axis=-1, keepdims=True)
        p = jnp.exp(sim)
        p = p / jnp.sum(p, axis=-1, keepdims=True)
        ctx = jnp.dot(p.astype(cdt), v.astype(cdt),
                      preferred_element_type=jnp.float32)
        ctx = proj(ctx, prep['wo'], prep['bo'])
        out = (jnp.dot(ctx.astype(cdt), prep['wbc'],
                       preferred_element_type=jnp.float32)
               + jnp.dot(qx.astype(cdt), prep['wbq'],
                         preferred_element_type=jnp.float32)
               + prep['bb'])
        return jnp.maximum(out, 0.0)

    return jax.vmap(single)(qx, kx, vx, mask)


# ----------------------------- main ------------------------------------------
if __name__ == "__main__":
    B, Cin, H, W = 2, 8, 16, 16          # query feats
    Hk, Wk = 4, 2                        # key/value feats (e.g. object regions)
    Cm = 32                              # attention channels
    Cout = 16                            # bottleneck out_channels
    # NOTE: production OCR sizes have Cin/Cm/Cout >= 128 so channels-last is
    # lane-dense there; demo sizes are intentionally tiny.

    root = jax.random.PRNGKey(0)
    kq, kk, kv, km, kp = jax.random.split(root, 5)

    query_feats = jax.random.normal(kq, (B, Cin, H, W), jnp.float32)
    key_feats = jax.random.normal(kk, (B, Cin, Hk, Wk), jnp.float32)
    value_feats = jax.random.normal(kv, (B, Cin, Hk, Wk), jnp.float32)
    key_mask = jax.random.bernoulli(km, 0.7, (B, 1, Hk, Wk)).astype(jnp.float32)

    params = init_params(kp, Cin, Cm, Cout)

    # tq=64 -> 4 query tiles per batch: exercises the tiled pipeline + K/V reuse
    out = object_attention_block(query_feats, key_feats, value_feats, key_mask,
                                 params, channels=Cm, tq=64)
    out = jax.block_until_ready(out)

    # correctness check against a pure-JAX reference on the same (B, N, C) layout
    Nq, Nk = H * W, Hk * Wk
    qx = jnp.transpose(query_feats.reshape(B, Cin, Nq), (0, 2, 1))
    kx = jnp.transpose(key_feats.reshape(B, Cin, Nk), (0, 2, 1))
    vx = jnp.transpose(value_feats.reshape(B, Cin, Nk), (0, 2, 1))
    msk = key_mask.reshape(B, 1, Nk)
    prep = _prepare_params(params, Cm)
    ref = _reference(qx, kx, vx, msk, prep)
    ref = jnp.transpose(ref, (0, 2, 1)).reshape(B, Cout, H, W)

    assert out.shape == (B, Cout, H, W)
    err = jnp.max(jnp.abs(out - ref))
    assert jnp.allclose(out, ref, rtol=5e-3, atol=5e-3), f"max abs err {err}"
    print("KERNEL_OK")
</pallas_src>

<mosaic_0001>
module attributes {stable_mosaic.version = 11 : i64} {
  func.func @_oab_kernel(%arg0: i32, %arg1: i32, %arg2: memref<1x64x8xbf16, #tpu.memory_space<vmem>>, %arg3: memref<1x8x8xbf16, #tpu.memory_space<vmem>>, %arg4: memref<1x8x8xbf16, #tpu.memory_space<vmem>>, %arg5: memref<1x1x8xf32, #tpu.memory_space<vmem>>, %arg6: memref<8x32xbf16, #tpu.memory_space<vmem>>, %arg7: memref<1x32xf32, #tpu.memory_space<vmem>>, %arg8: memref<32x32xbf16, #tpu.memory_space<vmem>>, %arg9: memref<1x32xf32, #tpu.memory_space<vmem>>, %arg10: memref<8x32xbf16, #tpu.memory_space<vmem>>, %arg11: memref<1x32xf32, #tpu.memory_space<vmem>>, %arg12: memref<32x32xbf16, #tpu.memory_space<vmem>>, %arg13: memref<1x32xf32, #tpu.memory_space<vmem>>, %arg14: memref<8x32xbf16, #tpu.memory_space<vmem>>, %arg15: memref<1x32xf32, #tpu.memory_space<vmem>>, %arg16: memref<32x8xbf16, #tpu.memory_space<vmem>>, %arg17: memref<1x8xf32, #tpu.memory_space<vmem>>, %arg18: memref<8x16xbf16, #tpu.memory_space<vmem>>, %arg19: memref<8x16xbf16, #tpu.memory_space<vmem>>, %arg20: memref<1x16xf32, #tpu.memory_space<vmem>>, %arg21: memref<1x64x16xf32, #tpu.memory_space<vmem>>, %arg22: memref<8x32xbf16, #tpu.memory_space<vmem>>, %arg23: memref<8x32xbf16, #tpu.memory_space<vmem>>) attributes {dimension_semantics = [#tpu.dimension_semantics<parallel>, #tpu.dimension_semantics<arbitrary>], iteration_bounds = array<i64: 2, 4>, scalar_prefetch = 0 : i64, scratch_operands = 2 : i64, tpu.core_type = #tpu.core_type<tc>, window_params = [{transform_indices = @transform_0, window_bounds = array<i64: 1, 64, 8>}, {transform_indices = @transform_1, window_bounds = array<i64: 1, 8, 8>}, {transform_indices = @transform_2, window_bounds = array<i64: 1, 8, 8>}, {transform_indices = @transform_3, window_bounds = array<i64: 1, 1, 8>}, {pipeline_mode = #tpu.pipeline_mode<synchronous>, transform_indices = @transform_4, window_bounds = array<i64: 8, 32>}, {pipeline_mode = #tpu.pipeline_mode<synchronous>, transform_indices = @transform_5, window_bounds = array<i64: 1, 32>}, {pipeline_mode = #tpu.pipeline_mode<synchronous>, transform_indices = @transform_6, window_bounds = array<i64: 32, 32>}, {pipeline_mode = #tpu.pipeline_mode<synchronous>, transform_indices = @transform_7, window_bounds = array<i64: 1, 32>}, {pipeline_mode = #tpu.pipeline_mode<synchronous>, transform_indices = @transform_8, window_bounds = array<i64: 8, 32>}, {pipeline_mode = #tpu.pipeline_mode<synchronous>, transform_indices = @transform_9, window_bounds = array<i64: 1, 32>}, {pipeline_mode = #tpu.pipeline_mode<synchronous>, transform_indices = @transform_10, window_bounds = array<i64: 32, 32>}, {pipeline_mode = #tpu.pipeline_mode<synchronous>, transform_indices = @transform_11, window_bounds = array<i64: 1, 32>}, {pipeline_mode = #tpu.pipeline_mode<synchronous>, transform_indices = @transform_12, window_bounds = array<i64: 8, 32>}, {pipeline_mode = #tpu.pipeline_mode<synchronous>, transform_indices = @transform_13, window_bounds = array<i64: 1, 32>}, {pipeline_mode = #tpu.pipeline_mode<synchronous>, transform_indices = @transform_14, window_bounds = array<i64: 32, 8>}, {pipeline_mode = #tpu.pipeline_mode<synchronous>, transform_indices = @transform_15, window_bounds = array<i64: 1, 8>}, {pipeline_mode = #tpu.pipeline_mode<synchronous>, transform_indices = @transform_16, window_bounds = array<i64: 8, 16>}, {pipeline_mode = #tpu.pipeline_mode<synchronous>, transform_indices = @transform_17, window_bounds = array<i64: 8, 16>}, {pipeline_mode = #tpu.pipeline_mode<synchronous>, transform_indices = @transform_18, window_bounds = array<i64: 1, 16>}, {transform_indices = @transform_19, window_bounds = array<i64: 1, 64, 16>}]} {
    %c0_i32 = arith.constant 0 : i32
    %0 = arith.cmpi eq, %arg1, %c0_i32 : i32
    %1 = arith.extui %0 : i1 to i32
    %c0_i32_0 = arith.constant 0 : i32
    %2 = arith.cmpi ne, %1, %c0_i32_0 : i32
    scf.if %2 {
      %c0_45 = arith.constant 0 : index
      %c0_46 = arith.constant 0 : index
      %c0_47 = arith.constant 0 : index
      %66 = vector.load %arg3[%c0_45, %c0_46, %c0_47] : memref<1x8x8xbf16, #tpu.memory_space<vmem>>, vector<1x8x8xbf16>
      %67 = vector.shape_cast %66 : vector<1x8x8xbf16> to vector<8x8xbf16>
      %c0_48 = arith.constant 0 : index
      %c0_49 = arith.constant 0 : index
      %c0_50 = arith.constant 0 : index
      %68 = vector.load %arg4[%c0_48, %c0_49, %c0_50] : memref<1x8x8xbf16, #tpu.memory_space<vmem>>, vector<1x8x8xbf16>
      %69 = vector.shape_cast %68 : vector<1x8x8xbf16> to vector<8x8xbf16>
      %c0_51 = arith.constant 0 : index
      %c0_52 = arith.constant 0 : index
      %70 = vector.load %arg10[%c0_51, %c0_52] : memref<8x32xbf16, #tpu.memory_space<vmem>>, vector<8x32xbf16>
      %cst_53 = arith.constant dense<0.000000e+00> : vector<8x32xf32>
      %71 = tpu.matmul %67, %70, %cst_53 {dimension_numbers = #tpu.dot_dimension_numbers<[1], [0], [0], [1], [0, 0, 1, 1], [], []>} : vector<8x8xbf16>, vector<8x32xbf16>, vector<8x32xf32> -> vector<8x32xf32>
      %c0_54 = arith.constant 0 : index
      %c0_55 = arith.constant 0 : index
      %72 = vector.load %arg11[%c0_54, %c0_55] : memref<1x32xf32, #tpu.memory_space<vmem>>, vector<1x32xf32>
      %73 = vector.broadcast %72 : vector<1x32xf32> to vector<8x32xf32>
      %74 = arith.addf %71, %73 : vector<8x32xf32>
      %cst_56 = arith.constant 0.000000e+00 : f32
      %75 = vector.broadcast %cst_56 : f32 to vector<8x32xf32>
      %76 = arith.maximumf %74, %75 : vector<8x32xf32>
      %77 = arith.truncf %76 : vector<8x32xf32> to vector<8x32xbf16>
      %c0_57 = arith.constant 0 : index
      %c0_58 = arith.constant 0 : index
      %78 = vector.load %arg12[%c0_57, %c0_58] : memref<32x32xbf16, #tpu.memory_space<vmem>>, vector<32x32xbf16>
      %cst_59 = arith.constant dense<0.000000e+00> : vector<8x32xf32>
      %79 = tpu.matmul %77, %78, %cst_59 {dimension_numbers = #tpu.dot_dimension_numbers<[1], [0], [0], [1], [0, 0, 1, 1], [], []>} : vector<8x32xbf16>, vector<32x32xbf16>, vector<8x32xf32> -> vector<8x32xf32>
      %c0_60 = arith.constant 0 : index
      %c0_61 = arith.constant 0 : index
      %80 = vector.load %arg13[%c0_60, %c0_61] : memref<1x32xf32, #tpu.memory_space<vmem>>, vector<1x32xf32>
      %81 = vector.broadcast %80 : vector<1x32xf32> to vector<8x32xf32>
      %82 = arith.addf %79, %81 : vector<8x32xf32>
      %cst_62 = arith.constant 0.000000e+00 : f32
      %83 = vector.broadcast %cst_62 : f32 to vector<8x32xf32>
      %84 = arith.maximumf %82, %83 : vector<8x32xf32>
      %85 = arith.truncf %84 : vector<8x32xf32> to vector<8x32xbf16>
      %c0_63 = arith.constant 0 : index
      %c0_64 = arith.constant 0 : index
      %86 = vector.load %arg22[%c0_63, %c0_64] : memref<8x32xbf16, #tpu.memory_space<vmem>>, vector<8x32xbf16>
      tpu.vector_store %arg22[%c0_63, %c0_64], %85 {strides = array<i32>} : memref<8x32xbf16, #tpu.memory_space<vmem>>, vector<8x32xbf16>,
      %c0_65 = arith.constant 0 : index
      %c0_66 = arith.constant 0 : index
      %87 = vector.load %arg14[%c0_65, %c0_66] : memref<8x32xbf16, #tpu.memory_space<vmem>>, vector<8x32xbf16>
      %cst_67 = arith.constant dense<0.000000e+00> : vector<8x32xf32>
      %88 = tpu.matmul %69, %87, %cst_67 {dimension_numbers = #tpu.dot_dimension_numbers<[1], [0], [0], [1], [0, 0, 1, 1], [], []>} : vector<8x8xbf16>, vector<8x32xbf16>, vector<8x32xf32> -> vector<8x32xf32>
      %c0_68 = arith.constant 0 : index
      %c0_69 = arith.constant 0 : index
      %89 = vector.load %arg15[%c0_68, %c0_69] : memref<1x32xf32, #tpu.memory_space<vmem>>, vector<1x32xf32>
      %90 = vector.broadcast %89 : vector<1x32xf32> to vector<8x32xf32>
      %91 = arith.addf %88, %90 : vector<8x32xf32>
      %cst_70 = arith.constant 0.000000e+00 : f32
      %92 = vector.broadcast %cst_70 : f32 to vector<8x32xf32>
      %93 = arith.maximumf %91, %92 : vector<8x32xf32>
      %94 = arith.truncf %93 : vector<8x32xf32> to vector<8x32xbf16>
      %c0_71 = arith.constant 0 : index
      %c0_72 = arith.constant 0 : index
      %95 = vector.load %arg23[%c0_71, %c0_72] : memref<8x32xbf16, #tpu.memory_space<vmem>>, vector<8x32xbf16>
      tpu.vector_store %arg23[%c0_71, %c0_72], %94 {strides = array<i32>} : memref<8x32xbf16, #tpu.memory_space<vmem>>, vector<8x32xbf16>,
    } else {
    }
    %c0 = arith.constant 0 : index
    %c0_1 = arith.constant 0 : index
    %c0_2 = arith.constant 0 : index
    %3 = vector.load %arg2[%c0, %c0_1, %c0_2] : memref<1x64x8xbf16, #tpu.memory_space<vmem>>, vector<1x64x8xbf16>
    %4 = vector.shape_cast %3 : vector<1x64x8xbf16> to vector<64x8xbf16>
    %c0_3 = arith.constant 0 : index
    %c0_4 = arith.constant 0 : index
    %c0_5 = arith.constant 0 : index
    %5 = vector.load %arg5[%c0_3, %c0_4, %c0_5] : memref<1x1x8xf32, #tpu.memory_space<vmem>>, vector<1x1x8xf32>
    %6 = vector.shape_cast %5 : vector<1x1x8xf32> to vector<1x8xf32>
    %c0_6 = arith.constant 0 : index
    %c0_7 = arith.constant 0 : index
    %7 = vector.load %arg6[%c0_6, %c0_7] : memref<8x32xbf16, #tpu.memory_space<vmem>>, vector<8x32xbf16>
    %cst = arith.constant dense<0.000000e+00> : vector<64x32xf32>
    %8 = tpu.matmul %4, %7, %cst {dimension_numbers = #tpu.dot_dimension_numbers<[1], [0], [0], [1], [0, 0, 1, 1], [], []>} : vector<64x8xbf16>, vector<8x32xbf16>, vector<64x32xf32> -> vector<64x32xf32>
    %c0_8 = arith.constant 0 : index
    %c0_9 = arith.constant 0 : index
    %9 = vector.load %arg7[%c0_8, %c0_9] : memref<1x32xf32, #tpu.memory_space<vmem>>, vector<1x32xf32>
    %10 = vector.broadcast %9 : vector<1x32xf32> to vector<64x32xf32>
    %11 = arith.addf %8, %10 : vector<64x32xf32>
    %cst_10 = arith.constant 0.000000e+00 : f32
    %12 = vector.broadcast %cst_10 : f32 to vector<64x32xf32>
    %13 = arith.maximumf %11, %12 : vector<64x32xf32>
    %14 = arith.truncf %13 : vector<64x32xf32> to vector<64x32xbf16>
    %c0_11 = arith.constant 0 : index
    %c0_12 = arith.constant 0 : index
    %15 = vector.load %arg8[%c0_11, %c0_12] : memref<32x32xbf16, #tpu.memory_space<vmem>>, vector<32x32xbf16>
    %cst_13 = arith.constant dense<0.000000e+00> : vector<64x32xf32>
    %16 = tpu.matmul %14, %15, %cst_13 {dimension_numbers = #tpu.dot_dimension_numbers<[1], [0], [0], [1], [0, 0, 1, 1], [], []>} : vector<64x32xbf16>, vector<32x32xbf16>, vector<64x32xf32> -> vector<64x32xf32>
    %c0_14 = arith.constant 0 : index
    %c0_15 = arith.constant 0 : index
    %17 = vector.load %arg9[%c0_14, %c0_15] : memref<1x32xf32, #tpu.memory_space<vmem>>, vector<1x32xf32>
    %18 = vector.broadcast %17 : vector<1x32xf32> to vector<64x32xf32>
    %19 = arith.addf %16, %18 : vector<64x32xf32>
    %cst_16 = arith.constant 0.000000e+00 : f32
    %20 = vector.broadcast %cst_16 : f32 to vector<64x32xf32>
    %21 = arith.maximumf %19, %20 : vector<64x32xf32>
    %22 = arith.truncf %21 : vector<64x32xf32> to vector<64x32xbf16>
    %c0_17 = arith.constant 0 : index
    %c0_18 = arith.constant 0 : index
    %23 = vector.load %arg22[%c0_17, %c0_18] : memref<8x32xbf16, #tpu.memory_space<vmem>>, vector<8x32xbf16>
    %cst_19 = arith.constant dense<0.000000e+00> : vector<64x8xf32>
    %24 = tpu.matmul %22, %23, %cst_19 {dimension_numbers = #tpu.dot_dimension_numbers<[1], [1], [0], [0], [0, 0, 1, 0], [], []>} : vector<64x32xbf16>, vector<8x32xbf16>, vector<64x8xf32> -> vector<64x8xf32>
    %cst_20 = arith.constant 0.000000e+00 : f32
    %25 = vector.broadcast %cst_20 : f32 to vector<1x8xf32>
    %26 = arith.cmpf ogt, %6, %25 : vector<1x8xf32>
    %cst_21 = arith.constant -1.000000e+07 : f32
    %27 = vector.shape_cast %26 : vector<1x8xi1> to vector<1x8xi1>
    %28 = vector.broadcast %27 : vector<1x8xi1> to vector<64x8xi1>
    %29 = vector.broadcast %cst_21 : f32 to vector<64x8xf32>
    %30 = arith.select %28, %24, %29 : vector<64x8xi1>, vector<64x8xf32>
    %cst_22 = arith.constant dense<0xFF800000> : vector<64xf32>
    %31 = vector.multi_reduction <maximumf>, %30, %cst_22 [1] : vector<64x8xf32> to vector<64xf32>
    %32 = vector.shape_cast %31 : vector<64xf32> to vector<64x1xf32>
    %33 = vector.broadcast %32 : vector<64x1xf32> to vector<64x8xf32>
    %34 = arith.subf %30, %33 : vector<64x8xf32>
    %35 = math.exp %34 : vector<64x8xf32>
    %cst_23 = arith.constant dense<0.000000e+00> : vector<64xf32>
    %36 = vector.multi_reduction <add>, %35, %cst_23 [1] : vector<64x8xf32> to vector<64xf32>
    %37 = vector.shape_cast %36 : vector<64xf32> to vector<64x1xf32>
    %38 = tpu.reciprocal %37 : vector<64x1xf32> -> vector<64x1xf32>
    %39 = vector.broadcast %38 : vector<64x1xf32> to vector<64x8xf32>
    %40 = arith.mulf %35, %39 : vector<64x8xf32>
    %41 = arith.truncf %40 : vector<64x8xf32> to vector<64x8xbf16>
    %c0_24 = arith.constant 0 : index
    %c0_25 = arith.constant 0 : index
    %42 = vector.load %arg23[%c0_24, %c0_25] : memref<8x32xbf16, #tpu.memory_space<vmem>>, vector<8x32xbf16>
    %cst_26 = arith.constant dense<0.000000e+00> : vector<64x32xf32>
    %43 = tpu.matmul %41, %42, %cst_26 {dimension_numbers = #tpu.dot_dimension_numbers<[1], [0], [0], [1], [0, 0, 1, 1], [], []>} : vector<64x8xbf16>, vector<8x32xbf16>, vector<64x32xf32> -> vector<64x32xf32>
    %44 = arith.truncf %43 : vector<64x32xf32> to vector<64x32xbf16>
    %c0_27 = arith.constant 0 : index
    %c0_28 = arith.constant 0 : index
    %45 = vector.load %arg16[%c0_27, %c0_28] : memref<32x8xbf16, #tpu.memory_space<vmem>>, vector<32x8xbf16>
    %cst_29 = arith.constant dense<0.000000e+00> : vector<64x8xf32>
    %46 = tpu.matmul %44, %45, %cst_29 {dimension_numbers = #tpu.dot_dimension_numbers<[1], [0], [0], [1], [0, 0, 1, 1], [], []>} : vector<64x32xbf16>, vector<32x8xbf16>, vector<64x8xf32> -> vector<64x8xf32>
    %c0_30 = arith.constant 0 : index
    %c0_31 = arith.constant 0 : index
    %47 = vector.load %arg17[%c0_30, %c0_31] : memref<1x8xf32, #tpu.memory_space<vmem>>, vector<1x8xf32>
    %48 = vector.broadcast %47 : vector<1x8xf32> to vector<64x8xf32>
    %49 = arith.addf %46, %48 : vector<64x8xf32>
    %cst_32 = arith.constant 0.000000e+00 : f32
    %50 = vector.broadcast %cst_32 : f32 to vector<64x8xf32>
    %51 = arith.maximumf %49, %50 : vector<64x8xf32>
    %52 = arith.truncf %51 : vector<64x8xf32> to vector<64x8xbf16>
    %c0_33 = arith.constant 0 : index
    %c0_34 = arith.constant 0 : index
    %53 = vector.load %arg18[%c0_33, %c0_34] : memref<8x16xbf16, #tpu.memory_space<vmem>>, vector<8x16xbf16>
    %cst_35 = arith.constant dense<0.000000e+00> : vector<64x16xf32>
    %54 = tpu.matmul %52, %53, %cst_35 {dimension_numbers = #tpu.dot_dimension_numbers<[1], [0], [0], [1], [0, 0, 1, 1], [], []>} : vector<64x8xbf16>, vector<8x16xbf16>, vector<64x16xf32> -> vector<64x16xf32>
    %c0_36 = arith.constant 0 : index
    %c0_37 = arith.constant 0 : index
    %55 = vector.load %arg19[%c0_36, %c0_37] : memref<8x16xbf16, #tpu.memory_space<vmem>>, vector<8x16xbf16>
    %cst_38 = arith.constant dense<0.000000e+00> : vector<64x16xf32>
    %56 = tpu.matmul %4, %55, %cst_38 {dimension_numbers = #tpu.dot_dimension_numbers<[1], [0], [0], [1], [0, 0, 1, 1], [], []>} : vector<64x8xbf16>, vector<8x16xbf16>, vector<64x16xf32> -> vector<64x16xf32>
    %57 = arith.addf %54, %56 : vector<64x16xf32>
    %c0_39 = arith.constant 0 : index
    %c0_40 = arith.constant 0 : index
    %58 = vector.load %arg20[%c0_39, %c0_40] : memref<1x16xf32, #tpu.memory_space<vmem>>, vector<1x16xf32>
    %59 = vector.broadcast %58 : vector<1x16xf32> to vector<64x16xf32>
    %60 = arith.addf %57, %59 : vector<64x16xf32>
    %cst_41 = arith.constant 0.000000e+00 : f32
    %61 = vector.broadcast %cst_41 : f32 to vector<64x16xf32>
    %62 = arith.maximumf %60, %61 : vector<64x16xf32>
    %c0_42 = arith.constant 0 : index
    %c0_43 = arith.constant 0 : index
    %c0_44 = arith.constant 0 : index
    %63 = vector.load %arg21[%c0_42, %c0_43, %c0_44] : memref<1x64x16xf32, #tpu.memory_space<vmem>>, vector<1x64x16xf32>
    %64 = vector.shape_cast %63 : vector<1x64x16xf32> to vector<64x16xf32>
    %65 = vector.shape_cast %62 : vector<64x16xf32> to vector<1x64x16xf32>
    tpu.vector_store %arg21[%c0_42, %c0_43, %c0_44], %65 {strides = array<i32>} : memref<1x64x16xf32, #tpu.memory_space<vmem>>, vector<1x64x16xf32>,
    return
  }
  func.func @transform_0(%arg0: i32, %arg1: i32) -> (i32, i32, i32) {
    %c0_i32 = arith.constant 0 : i32
    %c0_i32_0 = arith.constant 0 : i32
    return %arg0, %arg1, %c0_i32 : i32, i32, i32
  }
  func.func @transform_1(%arg0: i32, %arg1: i32) -> (i32, i32, i32) {
    %c0_i32 = arith.constant 0 : i32
    %c0_i32_0 = arith.constant 0 : i32
    %c0_i32_1 = arith.constant 0 : i32
    return %arg0, %c0_i32, %c0_i32_0 : i32, i32, i32
  }
  func.func @transform_2(%arg0: i32, %arg1: i32) -> (i32, i32, i32) {
    %c0_i32 = arith.constant 0 : i32
    %c0_i32_0 = arith.constant 0 : i32
    %c0_i32_1 = arith.constant 0 : i32
    return %arg0, %c0_i32, %c0_i32_0 : i32, i32, i32
  }
  func.func @transform_3(%arg0: i32, %arg1: i32) -> (i32, i32, i32) {
    %c0_i32 = arith.constant 0 : i32
    %c0_i32_0 = arith.constant 0 : i32
    %c0_i32_1 = arith.constant 0 : i32
    return %arg0, %c0_i32, %c0_i32_0 : i32, i32, i32
  }
  func.func @transform_4(%arg0: i32, %arg1: i32) -> (i32, i32) {
    %c0_i32 = arith.constant 0 : i32
    %c0_i32_0 = arith.constant 0 : i32
    %c0_i32_1 = arith.constant 0 : i32
    return %c0_i32, %c0_i32_0 : i32, i32
  }
  func.func @transform_5(%arg0: i32, %arg1: i32) -> (i32, i32) {
    %c0_i32 = arith.constant 0 : i32
    %c0_i32_0 = arith.constant 0 : i32
    %c0_i32_1 = arith.constant 0 : i32
    return %c0_i32, %c0_i32_0 : i32, i32
  }
  func.func @transform_6(%arg0: i32, %arg1: i32) -> (i32, i32) {
    %c0_i32 = arith.constant 0 : i32
    %c0_i32_0 = arith.constant 0 : i32
    %c0_i32_1 = arith.constant 0 : i32
    return %c0_i32, %c0_i32_0 : i32, i32
  }
  func.func @transform_7(%arg0: i32, %arg1: i32) -> (i32, i32) {
    %c0_i32 = arith.constant 0 : i32
    %c0_i32_0 = arith.constant 0 : i32
    %c0_i32_1 = arith.constant 0 : i32
    return %c0_i32, %c0_i32_0 : i32, i32
  }
  func.func @transform_8(%arg0: i32, %arg1: i32) -> (i32, i32) {
    %c0_i32 = arith.constant 0 : i32
    %c0_i32_0 = arith.constant 0 : i32
    %c0_i32_1 = arith.constant 0 : i32
    return %c0_i32, %c0_i32_0 : i32, i32
  }
  func.func @transform_9(%arg0: i32, %arg1: i32) -> (i32, i32) {
    %c0_i32 = arith.constant 0 : i32
    %c0_i32_0 = arith.constant 0 : i32
    %c0_i32_1 = arith.constant 0 : i32
    return %c0_i32, %c0_i32_0 : i32, i32
  }
  func.func @transform_10(%arg0: i32, %arg1: i32) -> (i32, i32) {
    %c0_i32 = arith.constant 0 : i32
    %c0_i32_0 = arith.constant 0 : i32
    %c0_i32_1 = arith.constant 0 : i32
    return %c0_i32, %c0_i32_0 : i32, i32
  }
  func.func @transform_11(%arg0: i32, %arg1: i32) -> (i32, i32) {
    %c0_i32 = arith.constant 0 : i32
    %c0_i32_0 = arith.constant 0 : i32
    %c0_i32_1 = arith.constant 0 : i32
    return %c0_i32, %c0_i32_0 : i32, i32
  }
  func.func @transform_12(%arg0: i32, %arg1: i32) -> (i32, i32) {
    %c0_i32 = arith.constant 0 : i32
    %c0_i32_0 = arith.constant 0 : i32
    %c0_i32_1 = arith.constant 0 : i32
    return %c0_i32, %c0_i32_0 : i32, i32
  }
  func.func @transform_13(%arg0: i32, %arg1: i32) -> (i32, i32) {
    %c0_i32 = arith.constant 0 : i32
    %c0_i32_0 = arith.constant 0 : i32
    %c0_i32_1 = arith.constant 0 : i32
    return %c0_i32, %c0_i32_0 : i32, i32
  }
  func.func @transform_14(%arg0: i32, %arg1: i32) -> (i32, i32) {
    %c0_i32 = arith.constant 0 : i32
    %c0_i32_0 = arith.constant 0 : i32
    %c0_i32_1 = arith.constant 0 : i32
    return %c0_i32, %c0_i32_0 : i32, i32
  }
  func.func @transform_15(%arg0: i32, %arg1: i32) -> (i32, i32) {
    %c0_i32 = arith.constant 0 : i32
    %c0_i32_0 = arith.constant 0 : i32
    %c0_i32_1 = arith.constant 0 : i32
    return %c0_i32, %c0_i32_0 : i32, i32
  }
  func.func @transform_16(%arg0: i32, %arg1: i32) -> (i32, i32) {
    %c0_i32 = arith.constant 0 : i32
    %c0_i32_0 = arith.constant 0 : i32
    %c0_i32_1 = arith.constant 0 : i32
    return %c0_i32, %c0_i32_0 : i32, i32
  }
  func.func @transform_17(%arg0: i32, %arg1: i32) -> (i32, i32) {
    %c0_i32 = arith.constant 0 : i32
    %c0_i32_0 = arith.constant 0 : i32
    %c0_i32_1 = arith.constant 0 : i32
    return %c0_i32, %c0_i32_0 : i32, i32
  }
  func.func @transform_18(%arg0: i32, %arg1: i32) -> (i32, i32) {
    %c0_i32 = arith.constant 0 : i32
    %c0_i32_0 = arith.constant 0 : i32
    %c0_i32_1 = arith.constant 0 : i32
    return %c0_i32, %c0_i32_0 : i32, i32
  }
  func.func @transform_19(%arg0: i32, %arg1: i32) -> (i32, i32, i32) {
    %c0_i32 = arith.constant 0 : i32
    %c0_i32_0 = arith.constant 0 : i32
    return %arg0, %arg1, %c0_i32 : i32, i32, i32
  }
}

</mosaic_0001>

<llo_original>
// kernel: tpu_custom_call.1
$region0: #{tpu_custom_call.1}
  #allocation0 [shape = 'u32[]', space=smem, size = 0x4, offset = 0x4, fixed_abs, tag = 'smem constant byte address 0x4 - core index']
  #allocation1 [shape = 'u32[144,128]{1,0:T(1,128)}', space=vmem, size = 0x12000, scoped, tag = 'internal scratch']
  #allocation2 [shape = 'bf16[8,32]{1,0:T(8,128)(2,1)}', space=vmem, size = 0x800, scoped, tag = 'scratch operand']
  #allocation3 [shape = 'bf16[8,32]{1,0:T(8,128)(2,1)}', space=vmem, size = 0x800, scoped, tag = 'scratch operand']
  %s0 = inlined_call_operand.vmem [shape: bf16[2,256,8], index: 0, kind: input, shape index: {}]
  %s1 = inlined_call_operand.vmem [shape: bf16[2,8,8], index: 1, kind: input, shape index: {}]
  %s2 = inlined_call_operand.vmem [shape: bf16[2,8,8], index: 2, kind: input, shape index: {}]
  %s3 = inlined_call_operand.vmem [shape: f32[2,1,8], index: 3, kind: input, shape index: {}]
  %s4 = inlined_call_operand.vmem [shape: bf16[8,32], index: 4, kind: input, shape index: {}]
  %s5 = inlined_call_operand.vmem [shape: f32[1,32], index: 5, kind: input, shape index: {}]
  %s6 = inlined_call_operand.vmem [shape: bf16[32,32], index: 6, kind: input, shape index: {}]
  %s7 = inlined_call_operand.vmem [shape: f32[1,32], index: 7, kind: input, shape index: {}]
  %s8 = inlined_call_operand.vmem [shape: bf16[8,32], index: 8, kind: input, shape index: {}]
  %s9 = inlined_call_operand.vmem [shape: f32[1,32], index: 9, kind: input, shape index: {}]
  %s10 = inlined_call_operand.vmem [shape: bf16[32,32], index: 10, kind: input, shape index: {}]
  %s11 = inlined_call_operand.vmem [shape: f32[1,32], index: 11, kind: input, shape index: {}]
  %s12 = inlined_call_operand.vmem [shape: bf16[8,32], index: 12, kind: input, shape index: {}]
  %s13 = inlined_call_operand.vmem [shape: f32[1,32], index: 13, kind: input, shape index: {}]
  %s14 = inlined_call_operand.vmem [shape: bf16[32,8], index: 14, kind: input, shape index: {}]
  %s15 = inlined_call_operand.vmem [shape: f32[1,8], index: 15, kind: input, shape index: {}]
  %s16 = inlined_call_operand.vmem [shape: bf16[8,16], index: 16, kind: input, shape index: {}]
  %s17 = inlined_call_operand.vmem [shape: bf16[8,16], index: 17, kind: input, shape index: {}]
  %s18 = inlined_call_operand.vmem [shape: f32[1,16], index: 18, kind: input, shape index: {}]
  %s19 = inlined_call_operand.vmem [shape: f32[2,256,16], index: 19, kind: output, shape index: {}]
  %s20 = sld [smem:[#allocation0]]
  $region113: #{tpu_custom_call.1} parent=0
    _
  %s22 = ssub.s32 1, %s20
  %s23 = scalar_select 0, %s22, %s20
  loop: start=0, step=1, limit=10
  $region2: #{tpu_custom_call.1} parent=0 // loop_pre_header
    _
  $region3: #{tpu_custom_call.1} parent=0 // loop_header
    %s25 = sphi 0, %s29
    %p26 = scmp.ge.s32.totalorder %s25, 10
    %s32 = sphi 0, %s44
    %s33 = sphi 0, %s40
    %s34 = sphi 0, %s32
    %s35 = sphi 0, %s33
    %s36 = sphi 0, %s34
    %s37 = sphi 0, %s35
    %s49 = sphi 0, %s51
    %s52 = sphi 0, %s49
    %s53 = sphi 0, %s52
    %s69 = sphi 0, %s53
    %s75 = sphi 0, %s77
    %s78 = sphi 0, %s75
    %s79 = sphi 0, %s78
    %s95 = sphi 0, %s79
    %s101 = sphi 0, %s103
    %s104 = sphi 0, %s101
    %s105 = sphi 0, %s104
    %s121 = sphi 0, %s105
    %s127 = sphi 0, %s129
    %s130 = sphi 0, %s127
    %s131 = sphi 0, %s130
    %s147 = sphi 0, %s131
    %s151 = sphi 0, %s151
    %s153 = sphi 0, %s151
    %s154 = sphi 0, %s153
    %s168 = sphi 0, %s154
    %s172 = sphi 0, %s172
    %s174 = sphi 0, %s172
    %s175 = sphi 0, %s174
    %s189 = sphi 0, %s175
    %s193 = sphi 0, %s193
    %s195 = sphi 0, %s193
    %s196 = sphi 0, %s195
    %s210 = sphi 0, %s196
    %s214 = sphi 0, %s214
    %s216 = sphi 0, %s214
    %s217 = sphi 0, %s216
    %s231 = sphi 0, %s217
    %s235 = sphi 0, %s235
    %s237 = sphi 0, %s235
    %s238 = sphi 0, %s237
    %s252 = sphi 0, %s238
    %s256 = sphi 0, %s256
    %s258 = sphi 0, %s256
    %s259 = sphi 0, %s258
    %s273 = sphi 0, %s259
    %s277 = sphi 0, %s277
    %s279 = sphi 0, %s277
    %s280 = sphi 0, %s279
    %s294 = sphi 0, %s280
    %s298 = sphi 0, %s298
    %s300 = sphi 0, %s298
    %s301 = sphi 0, %s300
    %s315 = sphi 0, %s301
    %s319 = sphi 0, %s319
    %s321 = sphi 0, %s319
    %s322 = sphi 0, %s321
    %s336 = sphi 0, %s322
    %s340 = sphi 0, %s340
    %s342 = sphi 0, %s340
    %s343 = sphi 0, %s342
    %s357 = sphi 0, %s343
    %s361 = sphi 0, %s361
    %s363 = sphi 0, %s361
    %s364 = sphi 0, %s363
    %s378 = sphi 0, %s364
    %s382 = sphi 0, %s382
    %s384 = sphi 0, %s382
    %s385 = sphi 0, %s384
    %s399 = sphi 0, %s385
    %s403 = sphi 0, %s403
    %s405 = sphi 0, %s403
    %s406 = sphi 0, %s405
    %s420 = sphi 0, %s406
    %s424 = sphi 0, %s424
    %s426 = sphi 0, %s424
    %s427 = sphi 0, %s426
    %s441 = sphi 0, %s427
    %s445 = sphi 0, %s445
    %s447 = sphi 0, %s445
    %s448 = sphi 0, %s447
    %s462 = sphi 0, %s448
    %s470 = sphi 0, %s472
    %s473 = sphi 0, %s470
    %s474 = sphi 0, %s473
    %s490 = sphi 0, %s474
  $region4: #{tpu_custom_call.1} parent=0 // loop_header_branch
    %28 = sbr.rel (%p26) target = $region8
  $region5: #{tpu_custom_call.1} parent=0 // loop_body
    %s30 = ssub.s32 %s25, 1
    %s31 = ssub.s32 %s25, 2
    %s38 = sadd.s32 1, %s33
    %p39 = scmp.ge.s32.totalorder %s38, 4
    %s40 = scalar_select %p39, 0, %s38
    %s41 = sadd.s32 1, %s32
    %s42 = scalar_select %p39, %s41, %s32
    %p43 = scmp.ge.s32.totalorder %s42, 2
    %s44 = scalar_select %p43, 0, %s42
    %s45 = ssub.s32 %s32, %s44
    %s46 = ssub.s32 %s33, %s40
    %s47 = sor.u32 %s45, %s46
    %p48 = scmp.eq.s32.totalorder %s47, 0
    %s50 = sadd.s32 %s49, 1
    %s51 = scalar_select %p48, %s49, %s50
    %p54 = pneg %p48
    %p55 = scmp.eq.s32.totalorder %s25, 7
    %p56 = por %p54, %p55
    %p57 = scmp.ne.s32.totalorder %s49, %s52
    %p58 = scmp.eq.s32.totalorder %s25, 0
    %p59 = por %p57, %p58
    %p60 = scmp.ne.s32.totalorder %s49, %s52
    %p61 = scmp.eq.s32.totalorder %s30, 7
    %p62 = por %p60, %p61
    %p63 = scmp.ne.s32.totalorder %s52, %s53
    %p64 = scmp.eq.s32.totalorder %s30, 0
    %p65 = por %p63, %p64
    %p66 = scmp.ne.s32.totalorder %s52, %s53
    %p67 = scmp.eq.s32.totalorder %s31, 7
    %p68 = por %p66, %p67
    %p70 = scmp.ne.s32.totalorder %s53, %s69
    %p71 = scmp.eq.s32.totalorder %s31, 0
    %p72 = por %p70, %p71
    %s73 = ssub.s32 %s32, %s44
    %p74 = scmp.eq.s32.totalorder %s73, 0
    %s76 = sadd.s32 %s75, 1
    %s77 = scalar_select %p74, %s75, %s76
    %p80 = pneg %p74
    %p81 = scmp.eq.s32.totalorder %s25, 7
    %p82 = por %p80, %p81
    %p83 = scmp.ne.s32.totalorder %s75, %s78
    %p84 = scmp.eq.s32.totalorder %s25, 0
    %p85 = por %p83, %p84
    %p86 = scmp.ne.s32.totalorder %s75, %s78
    %p87 = scmp.eq.s32.totalorder %s30, 7
    %p88 = por %p86, %p87
    %p89 = scmp.ne.s32.totalorder %s78, %s79
    %p90 = scmp.eq.s32.totalorder %s30, 0
    %p91 = por %p89, %p90
    %p92 = scmp.ne.s32.totalorder %s78, %s79
    %p93 = scmp.eq.s32.totalorder %s31, 7
    %p94 = por %p92, %p93
    %p96 = scmp.ne.s32.totalorder %s79, %s95
    %p97 = scmp.eq.s32.totalorder %s31, 0
    %p98 = por %p96, %p97
    %s99 = ssub.s32 %s32, %s44
    %p100 = scmp.eq.s32.totalorder %s99, 0
    %s102 = sadd.s32 %s101, 1
    %s103 = scalar_select %p100, %s101, %s102
    %p106 = pneg %p100
    %p107 = scmp.eq.s32.totalorder %s25, 7
    %p108 = por %p106, %p107
    %p109 = scmp.ne.s32.totalorder %s101, %s104
    %p110 = scmp.eq.s32.totalorder %s25, 0
    %p111 = por %p109, %p110
    %p112 = scmp.ne.s32.totalorder %s101, %s104
    %p113 = scmp.eq.s32.totalorder %s30, 7
    %p114 = por %p112, %p113
    %p115 = scmp.ne.s32.totalorder %s104, %s105
    %p116 = scmp.eq.s32.totalorder %s30, 0
    %p117 = por %p115, %p116
    %p118 = scmp.ne.s32.totalorder %s104, %s105
    %p119 = scmp.eq.s32.totalorder %s31, 7
    %p120 = por %p118, %p119
    %p122 = scmp.ne.s32.totalorder %s105, %s121
    %p123 = scmp.eq.s32.totalorder %s31, 0
    %p124 = por %p122, %p123
    %s125 = ssub.s32 %s32, %s44
    %p126 = scmp.eq.s32.totalorder %s125, 0
    %s128 = sadd.s32 %s127, 1
    %s129 = scalar_select %p126, %s127, %s128
    %p132 = pneg %p126
    %p133 = scmp.eq.s32.totalorder %s25, 7
    %p134 = por %p132, %p133
    %p135 = scmp.ne.s32.totalorder %s127, %s130
    %p136 = scmp.eq.s32.totalorder %s25, 0
    %p137 = por %p135, %p136
    %p138 = scmp.ne.s32.totalorder %s127, %s130
    %p139 = scmp.eq.s32.totalorder %s30, 7
    %p140 = por %p138, %p139
    %p141 = scmp.ne.s32.totalorder %s130, %s131
    %p142 = scmp.eq.s32.totalorder %s30, 0
    %p143 = por %p141, %p142
    %p144 = scmp.ne.s32.totalorder %s130, %s131
    %p145 = scmp.eq.s32.totalorder %s31, 7
    %p146 = por %p144, %p145
    %p148 = scmp.ne.s32.totalorder %s131, %s147
    %p149 = scmp.eq.s32.totalorder %s31, 0
    %p150 = por %p148, %p149
    %s152 = sadd.s32 %s151, 1
    %p155 = scmp.eq.s32.totalorder %s25, 7
    %p156 = scmp.ne.s32.totalorder %s151, %s153
    %p157 = scmp.eq.s32.totalorder %s25, 0
    %p158 = por %p156, %p157
    %p159 = scmp.ne.s32.totalorder %s151, %s153
    %p160 = scmp.eq.s32.totalorder %s30, 7
    %p161 = por %p159, %p160
    %p162 = scmp.ne.s32.totalorder %s153, %s154
    %p163 = scmp.eq.s32.totalorder %s30, 0
    %p164 = por %p162, %p163
    %p165 = scmp.ne.s32.totalorder %s153, %s154
    %p166 = scmp.eq.s32.totalorder %s31, 7
    %p167 = por %p165, %p166
    %p169 = scmp.ne.s32.totalorder %s154, %s168
    %p170 = scmp.eq.s32.totalorder %s31, 0
    %p171 = por %p169, %p170
    %s173 = sadd.s32 %s172, 1
    %p176 = scmp.eq.s32.totalorder %s25, 7
    %p177 = scmp.ne.s32.totalorder %s172, %s174
    %p178 = scmp.eq.s32.totalorder %s25, 0
    %p179 = por %p177, %p178
    %p180 = scmp.ne.s32.totalorder %s172, %s174
    %p181 = scmp.eq.s32.totalorder %s30, 7
    %p182 = por %p180, %p181
    %p183 = scmp.ne.s32.totalorder %s174, %s175
    %p184 = scmp.eq.s32.totalorder %s30, 0
    %p185 = por %p183, %p184
    %p186 = scmp.ne.s32.totalorder %s174, %s175
    %p187 = scmp.eq.s32.totalorder %s31, 7
    %p188 = por %p186, %p187
    %p190 = scmp.ne.s32.totalorder %s175, %s189
    %p191 = scmp.eq.s32.totalorder %s31, 0
    %p192 = por %p190, %p191
    %s194 = sadd.s32 %s193, 1
    %p197 = scmp.eq.s32.totalorder %s25, 7
    %p198 = scmp.ne.s32.totalorder %s193, %s195
    %p199 = scmp.eq.s32.totalorder %s25, 0
    %p200 = por %p198, %p199
    %p201 = scmp.ne.s32.totalorder %s193, %s195
    %p202 = scmp.eq.s32.totalorder %s30, 7
    %p203 = por %p201, %p202
    %p204 = scmp.ne.s32.totalorder %s195, %s196
    %p205 = scmp.eq.s32.totalorder %s30, 0
    %p206 = por %p204, %p205
    %p207 = scmp.ne.s32.totalorder %s195, %s196
    %p208 = scmp.eq.s32.totalorder %s31, 7
    %p209 = por %p207, %p208
    %p211 = scmp.ne.s32.totalorder %s196, %s210
    %p212 = scmp.eq.s32.totalorder %s31, 0
    %p213 = por %p211, %p212
    %s215 = sadd.s32 %s214, 1
    %p218 = scmp.eq.s32.totalorder %s25, 7
    %p219 = scmp.ne.s32.totalorder %s214, %s216
    %p220 = scmp.eq.s32.totalorder %s25, 0
    %p221 = por %p219, %p220
    %p222 = scmp.ne.s32.totalorder %s214, %s216
    %p223 = scmp.eq.s32.totalorder %s30, 7
    %p224 = por %p222, %p223
    %p225 = scmp.ne.s32.totalorder %s216, %s217
    %p226 = scmp.eq.s32.totalorder %s30, 0
    %p227 = por %p225, %p226
    %p228 = scmp.ne.s32.totalorder %s216, %s217
    %p229 = scmp.eq.s32.totalorder %s31, 7
    %p230 = por %p228, %p229
    %p232 = scmp.ne.s32.totalorder %s217, %s231
    %p233 = scmp.eq.s32.totalorder %s31, 0
    %p234 = por %p232, %p233
    %s236 = sadd.s32 %s235, 1
    %p239 = scmp.eq.s32.totalorder %s25, 7
    %p240 = scmp.ne.s32.totalorder %s235, %s237
    %p241 = scmp.eq.s32.totalorder %s25, 0
    %p242 = por %p240, %p241
    %p243 = scmp.ne.s32.totalorder %s235, %s237
    %p244 = scmp.eq.s32.totalorder %s30, 7
    %p245 = por %p243, %p244
    %p246 = scmp.ne.s32.totalorder %s237, %s238
    %p247 = scmp.eq.s32.totalorder %s30, 0
    %p248 = por %p246, %p247
    %p249 = scmp.ne.s32.totalorder %s237, %s238
    %p250 = scmp.eq.s32.totalorder %s31, 7
    %p251 = por %p249, %p250
    %p253 = scmp.ne.s32.totalorder %s238, %s252
    %p254 = scmp.eq.s32.totalorder %s31, 0
    %p255 = por %p253, %p254
    %s257 = sadd.s32 %s256, 1
    %p260 = scmp.eq.s32.totalorder %s25, 7
    %p261 = scmp.ne.s32.totalorder %s256, %s258
    %p262 = scmp.eq.s32.totalorder %s25, 0
    %p263 = por %p261, %p262
    %p264 = scmp.ne.s32.totalorder %s256, %s258
    %p265 = scmp.eq.s32.totalorder %s30, 7
    %p266 = por %p264, %p265
    %p267 = scmp.ne.s32.totalorder %s258, %s259
    %p268 = scmp.eq.s32.totalorder %s30, 0
    %p269 = por %p267, %p268
    %p270 = scmp.ne.s32.totalorder %s258, %s259
    %p271 = scmp.eq.s32.totalorder %s31, 7
    %p272 = por %p270, %p271
    %p274 = scmp.ne.s32.totalorder %s259, %s273
    %p275 = scmp.eq.s32.totalorder %s31, 0
    %p276 = por %p274, %p275
    %s278 = sadd.s32 %s277, 1
    %p281 = scmp.eq.s32.totalorder %s25, 7
    %p282 = scmp.ne.s32.totalorder %s277, %s279
    %p283 = scmp.eq.s32.totalorder %s25, 0
    %p284 = por %p282, %p283
    %p285 = scmp.ne.s32.totalorder %s277, %s279
    %p286 = scmp.eq.s32.totalorder %s30, 7
    %p287 = por %p285, %p286
    %p288 = scmp.ne.s32.totalorder %s279, %s280
    %p289 = scmp.eq.s32.totalorder %s30, 0
    %p290 = por %p288, %p289
    %p291 = scmp.ne.s32.totalorder %s279, %s280
    %p292 = scmp.eq.s32.totalorder %s31, 7
    %p293 = por %p291, %p292
    %p295 = scmp.ne.s32.totalorder %s280, %s294
    %p296 = scmp.eq.s32.totalorder %s31, 0
    %p297 = por %p295, %p296
    %s299 = sadd.s32 %s298, 1
    %p302 = scmp.eq.s32.totalorder %s25, 7
    %p303 = scmp.ne.s32.totalorder %s298, %s300
    %p304 = scmp.eq.s32.totalorder %s25, 0
    %p305 = por %p303, %p304
    %p306 = scmp.ne.s32.totalorder %s298, %s300
    %p307 = scmp.eq.s32.totalorder %s30, 7
    %p308 = por %p306, %p307
    %p309 = scmp.ne.s32.totalorder %s300, %s301
    %p310 = scmp.eq.s32.totalorder %s30, 0
    %p311 = por %p309, %p310
    %p312 = scmp.ne.s32.totalorder %s300, %s301
    %p313 = scmp.eq.s32.totalorder %s31, 7
    %p314 = por %p312, %p313
    %p316 = scmp.ne.s32.totalorder %s301, %s315
    %p317 = scmp.eq.s32.totalorder %s31, 0
    %p318 = por %p316, %p317
    %s320 = sadd.s32 %s319, 1
    %p323 = scmp.eq.s32.totalorder %s25, 7
    %p324 = scmp.ne.s32.totalorder %s319, %s321
    %p325 = scmp.eq.s32.totalorder %s25, 0
    %p326 = por %p324, %p325
    %p327 = scmp.ne.s32.totalorder %s319, %s321
    %p328 = scmp.eq.s32.totalorder %s30, 7
    %p329 = por %p327, %p328
    %p330 = scmp.ne.s32.totalorder %s321, %s322
    %p331 = scmp.eq.s32.totalorder %s30, 0
    %p332 = por %p330, %p331
    %p333 = scmp.ne.s32.totalorder %s321, %s322
    %p334 = scmp.eq.s32.totalorder %s31, 7
    %p335 = por %p333, %p334
    %p337 = scmp.ne.s32.totalorder %s322, %s336
    %p338 = scmp.eq.s32.totalorder %s31, 0
    %p339 = por %p337, %p338
    %s341 = sadd.s32 %s340, 1
    %p344 = scmp.eq.s32.totalorder %s25, 7
    %p345 = scmp.ne.s32.totalorder %s340, %s342
    %p346 = scmp.eq.s32.totalorder %s25, 0
    %p347 = por %p345, %p346
    %p348 = scmp.ne.s32.totalorder %s340, %s342
    %p349 = scmp.eq.s32.totalorder %s30, 7
    %p350 = por %p348, %p349
    %p351 = scmp.ne.s32.totalorder %s342, %s343
    %p352 = scmp.eq.s32.totalorder %s30, 0
    %p353 = por %p351, %p352
    %p354 = scmp.ne.s32.totalorder %s342, %s343
    %p355 = scmp.eq.s32.totalorder %s31, 7
    %p356 = por %p354, %p355
    %p358 = scmp.ne.s32.totalorder %s343, %s357
    %p359 = scmp.eq.s32.totalorder %s31, 0
    %p360 = por %p358, %p359
    %s362 = sadd.s32 %s361, 1
    %p365 = scmp.eq.s32.totalorder %s25, 7
    %p366 = scmp.ne.s32.totalorder %s361, %s363
    %p367 = scmp.eq.s32.totalorder %s25, 0
    %p368 = por %p366, %p367
    %p369 = scmp.ne.s32.totalorder %s361, %s363
    %p370 = scmp.eq.s32.totalorder %s30, 7
    %p371 = por %p369, %p370
    %p372 = scmp.ne.s32.totalorder %s363, %s364
    %p373 = scmp.eq.s32.totalorder %s30, 0
    %p374 = por %p372, %p373
    %p375 = scmp.ne.s32.totalorder %s363, %s364
    %p376 = scmp.eq.s32.totalorder %s31, 7
    %p377 = por %p375, %p376
    %p379 = scmp.ne.s32.totalorder %s364, %s378
    %p380 = scmp.eq.s32.totalorder %s31, 0
    %p381 = por %p379, %p380
    %s383 = sadd.s32 %s382, 1
    %p386 = scmp.eq.s32.totalorder %s25, 7
    %p387 = scmp.ne.s32.totalorder %s382, %s384
    %p388 = scmp.eq.s32.totalorder %s25, 0
    %p389 = por %p387, %p388
    %p390 = scmp.ne.s32.totalorder %s382, %s384
    %p391 = scmp.eq.s32.totalorder %s30, 7
    %p392 = por %p390, %p391
    %p393 = scmp.ne.s32.totalorder %s384, %s385
    %p394 = scmp.eq.s32.totalorder %s30, 0
    %p395 = por %p393, %p394
    %p396 = scmp.ne.s32.totalorder %s384, %s385
    %p397 = scmp.eq.s32.totalorder %s31, 7
    %p398 = por %p396, %p397
    %p400 = scmp.ne.s32.totalorder %s385, %s399
    %p401 = scmp.eq.s32.totalorder %s31, 0
    %p402 = por %p400, %p401
    %s404 = sadd.s32 %s403, 1
    %p407 = scmp.eq.s32.totalorder %s25, 7
    %p408 = scmp.ne.s32.totalorder %s403, %s405
    %p409 = scmp.eq.s32.totalorder %s25, 0
    %p410 = por %p408, %p409
    %p411 = scmp.ne.s32.totalorder %s403, %s405
    %p412 = scmp.eq.s32.totalorder %s30, 7
    %p413 = por %p411, %p412
    %p414 = scmp.ne.s32.totalorder %s405, %s406
    %p415 = scmp.eq.s32.totalorder %s30, 0
    %p416 = por %p414, %p415
    %p417 = scmp.ne.s32.totalorder %s405, %s406
    %p418 = scmp.eq.s32.totalorder %s31, 7
    %p419 = por %p417, %p418
    %p421 = scmp.ne.s32.totalorder %s406, %s420
    %p422 = scmp.eq.s32.totalorder %s31, 0
    %p423 = por %p421, %p422
    %s425 = sadd.s32 %s424, 1
    %p428 = scmp.eq.s32.totalorder %s25, 7
    %p429 = scmp.ne.s32.totalorder %s424, %s426
    %p430 = scmp.eq.s32.totalorder %s25, 0
    %p431 = por %p429, %p430
    %p432 = scmp.ne.s32.totalorder %s424, %s426
    %p433 = scmp.eq.s32.totalorder %s30, 7
    %p434 = por %p432, %p433
    %p435 = scmp.ne.s32.totalorder %s426, %s427
    %p436 = scmp.eq.s32.totalorder %s30, 0
    %p437 = por %p435, %p436
    %p438 = scmp.ne.s32.totalorder %s426, %s427
    %p439 = scmp.eq.s32.totalorder %s31, 7
    %p440 = por %p438, %p439
    %p442 = scmp.ne.s32.totalorder %s427, %s441
    %p443 = scmp.eq.s32.totalorder %s31, 0
    %p444 = por %p442, %p443
    %s446 = sadd.s32 %s445, 1
    %p449 = scmp.eq.s32.totalorder %s25, 7
    %p450 = scmp.ne.s32.totalorder %s445, %s447
    %p451 = scmp.eq.s32.totalorder %s25, 0
    %p452 = por %p450, %p451
    %p453 = scmp.ne.s32.totalorder %s445, %s447
    %p454 = scmp.eq.s32.totalorder %s30, 7
    %p455 = por %p453, %p454
    %p456 = scmp.ne.s32.totalorder %s447, %s448
    %p457 = scmp.eq.s32.totalorder %s30, 0
    %p458 = por %p456, %p457
    %p459 = scmp.ne.s32.totalorder %s447, %s448
    %p460 = scmp.eq.s32.totalorder %s31, 7
    %p461 = por %p459, %p460
    %p463 = scmp.ne.s32.totalorder %s448, %s462
    %p464 = scmp.eq.s32.totalorder %s31, 0
    %p465 = por %p463, %p464
    %s466 = ssub.s32 %s32, %s44
    %s467 = ssub.s32 %s33, %s40
    %s468 = sor.u32 %s466, %s467
    %p469 = scmp.eq.s32.totalorder %s468, 0
    %s471 = sadd.s32 %s470, 1
    %s472 = scalar_select %p469, %s470, %s471
    %p475 = pneg %p469
    %p476 = scmp.eq.s32.totalorder %s25, 7
    %p477 = por %p475, %p476
    %p478 = scmp.ne.s32.totalorder %s470, %s473
    %p479 = scmp.eq.s32.totalorder %s25, 0
    %p480 = por %p478, %p479
    %p481 = scmp.ne.s32.totalorder %s470, %s473
    %p482 = scmp.eq.s32.totalorder %s30, 7
    %p483 = por %p481, %p482
    %p484 = scmp.ne.s32.totalorder %s473, %s474
    %p485 = scmp.eq.s32.totalorder %s30, 0
    %p486 = por %p484, %p485
    %p487 = scmp.ne.s32.totalorder %s473, %s474
    %p488 = scmp.eq.s32.totalorder %s31, 7
    %p489 = por %p487, %p488
    %p491 = scmp.ne.s32.totalorder %s474, %s490
    %p492 = scmp.eq.s32.totalorder %s31, 0
    %p493 = por %p491, %p492
    %p494 = scmp.le.s32.totalorder 1, %s25
    %p495 = scmp.lt.s32.totalorder %s25, 9
    %p496 = pnand %p494, %p495
    %p497 = pneg %p496
    // Predicated region
    $region9: #{tpu_custom_call.1} parent=5 // pred_check
      _
    $region10: #{tpu_custom_call.1} parent=5 // pred_check_branch
      %499 = sbr.rel (%p496) target = $region12
    $region11: #{tpu_custom_call.1} parent=5 // pred_region
      %s500 = ssub.s32 %s25, 1
      // Predicated region
      $region13: #{tpu_custom_call.1} parent=11 // pred_check
        %p501 = pneg %p164
      $region14: #{tpu_custom_call.1} parent=11 // pred_check_branch
        %503 = sbr.rel (%p501) target = $region16
      $region15: #{tpu_custom_call.1} parent=11 // pred_region
        _
      $region16: #{tpu_custom_call.1} parent=11 // pred_fallthru
        _
      // Predicated region
      $region17: #{tpu_custom_call.1} parent=11 // pred_check
        %p504 = pneg %p185
      $region18: #{tpu_custom_call.1} parent=11 // pred_check_branch
        %506 = sbr.rel (%p504) target = $region20
      $region19: #{tpu_custom_call.1} parent=11 // pred_region
        _
      $region20: #{tpu_custom_call.1} parent=11 // pred_fallthru
        _
      // Predicated region
      $region21: #{tpu_custom_call.1} parent=11 // pred_check
        %p507 = pneg %p206
      $region22: #{tpu_custom_call.1} parent=11 // pred_check_branch
        %509 = sbr.rel (%p507) target = $region24
      $region23: #{tpu_custom_call.1} parent=11 // pred_region
        _
      $region24: #{tpu_custom_call.1} parent=11 // pred_fallthru
        _
      // Predicated region
      $region25: #{tpu_custom_call.1} parent=11 // pred_check
        %p510 = pneg %p227
      $region26: #{tpu_custom_call.1} parent=11 // pred_check_branch
        %512 = sbr.rel (%p510) target = $region28
      $region27: #{tpu_custom_call.1} parent=11 // pred_region
        _
      $region28: #{tpu_custom_call.1} parent=11 // pred_fallthru
        _
      // Predicated region
      $region29: #{tpu_custom_call.1} parent=11 // pred_check
        %p513 = pneg %p248
      $region30: #{tpu_custom_call.1} parent=11 // pred_check_branch
        %515 = sbr.rel (%p513) target = $region32
      $region31: #{tpu_custom_call.1} parent=11 // pred_region
        _
      $region32: #{tpu_custom_call.1} parent=11 // pred_fallthru
        _
      // Predicated region
      $region33: #{tpu_custom_call.1} parent=11 // pred_check
        %p516 = pneg %p269
      $region34: #{tpu_custom_call.1} parent=11 // pred_check_branch
        %518 = sbr.rel (%p516) target = $region36
      $region35: #{tpu_custom_call.1} parent=11 // pred_region
        _
      $region36: #{tpu_custom_call.1} parent=11 // pred_fallthru
        _
      // Predicated region
      $region37: #{tpu_custom_call.1} parent=11 // pred_check
        %p519 = pneg %p290
      $region38: #{tpu_custom_call.1} parent=11 // pred_check_branch
        %521 = sbr.rel (%p519) target = $region40
      $region39: #{tpu_custom_call.1} parent=11 // pred_region
        _
      $region40: #{tpu_custom_call.1} parent=11 // pred_fallthru
        _
      // Predicated region
      $region41: #{tpu_custom_call.1} parent=11 // pred_check
        %p522 = pneg %p311
      $region42: #{tpu_custom_call.1} parent=11 // pred_check_branch
        %524 = sbr.rel (%p522) target = $region44
      $region43: #{tpu_custom_call.1} parent=11 // pred_region
        _
      $region44: #{tpu_custom_call.1} parent=11 // pred_fallthru
        _
      // Predicated region
      $region45: #{tpu_custom_call.1} parent=11 // pred_check
        %p525 = pneg %p332
      $region46: #{tpu_custom_call.1} parent=11 // pred_check_branch
        %527 = sbr.rel (%p525) target = $region48
      $region47: #{tpu_custom_call.1} parent=11 // pred_region
        _
      $region48: #{tpu_custom_call.1} parent=11 // pred_fallthru
        _
      // Predicated region
      $region49: #{tpu_custom_call.1} parent=11 // pred_check
        %p528 = pneg %p353
      $region50: #{tpu_custom_call.1} parent=11 // pred_check_branch
        %530 = sbr.rel (%p528) target = $region52
      $region51: #{tpu_custom_call.1} parent=11 // pred_region
        _
      $region52: #{tpu_custom_call.1} parent=11 // pred_fallthru
        _
      // Predicated region
      $region53: #{tpu_custom_call.1} parent=11 // pred_check
        %p531 = pneg %p374
      $region54: #{tpu_custom_call.1} parent=11 // pred_check_branch
        %533 = sbr.rel (%p531) target = $region56
      $region55: #{tpu_custom_call.1} parent=11 // pred_region
        _
      $region56: #{tpu_custom_call.1} parent=11 // pred_fallthru
        _
      // Predicated region
      $region57: #{tpu_custom_call.1} parent=11 // pred_check
        %p534 = pneg %p395
      $region58: #{tpu_custom_call.1} parent=11 // pred_check_branch
        %536 = sbr.rel (%p534) target = $region60
      $region59: #{tpu_custom_call.1} parent=11 // pred_region
        _
      $region60: #{tpu_custom_call.1} parent=11 // pred_fallthru
        _
      // Predicated region
      $region61: #{tpu_custom_call.1} parent=11 // pred_check
        %p537 = pneg %p416
      $region62: #{tpu_custom_call.1} parent=11 // pred_check_branch
        %539 = sbr.rel (%p537) target = $region64
      $region63: #{tpu_custom_call.1} parent=11 // pred_region
        _
      $region64: #{tpu_custom_call.1} parent=11 // pred_fallthru
        _
      // Predicated region
      $region65: #{tpu_custom_call.1} parent=11 // pred_check
        %p540 = pneg %p437
      $region66: #{tpu_custom_call.1} parent=11 // pred_check_branch
        %542 = sbr.rel (%p540) target = $region68
      $region67: #{tpu_custom_call.1} parent=11 // pred_region
        _
      $region68: #{tpu_custom_call.1} parent=11 // pred_fallthru
        _
      // Predicated region
      $region69: #{tpu_custom_call.1} parent=11 // pred_check
        %p543 = pneg %p458
      $region70: #{tpu_custom_call.1} parent=11 // pred_check_branch
        %545 = sbr.rel (%p543) target = $region72
      $region71: #{tpu_custom_call.1} parent=11 // pred_region
        _
      $region72: #{tpu_custom_call.1} parent=11 // pred_fallthru
        _
    $region12: #{tpu_custom_call.1} parent=5 // pred_fallthru
      _
    %p546 = scmp.lt.s32.totalorder %s25, 8
    // Predicated region
    $region73: #{tpu_custom_call.1} parent=5 // pred_check
      %p547 = pneg %p546
    $region74: #{tpu_custom_call.1} parent=5 // pred_check_branch
      %549 = sbr.rel (%p547) target = $region76
    $region75: #{tpu_custom_call.1} parent=5 // pred_region
      // Predicated region
      $region77: #{tpu_custom_call.1} parent=75 // pred_check
        %p550 = pneg %p59
      $region78: #{tpu_custom_call.1} parent=75 // pred_check_branch
        %552 = sbr.rel (%p550) target = $region80
      $region79: #{tpu_custom_call.1} parent=75 // pred_region
        %s553 = smul.u32 8, %s33
        %p554 = scmp.lt.s32.totalorder %s32, 1
        %s555 = scalar_select %p554, %s32, 1
        %p556 = scmp.lt.s32.totalorder %s553, 31
        %s557 = scalar_select %p556, %s553, 31
        %s558 = smul.addr %s555, 32
        %s559 = sadd.s32 %s557, %s558
        %s560 = smul.addr %s559, 4
        %s561 = scalar_lea.vmem %s0, %s560
        %s562 = smul.u32 8, %s33
      $region80: #{tpu_custom_call.1} parent=75 // pred_fallthru
        _
      // Predicated region
      $region81: #{tpu_custom_call.1} parent=75 // pred_check
        %p563 = pneg %p85
      $region82: #{tpu_custom_call.1} parent=75 // pred_check_branch
        %565 = sbr.rel (%p563) target = $region84
      $region83: #{tpu_custom_call.1} parent=75 // pred_region
        %p566 = scmp.lt.s32.totalorder %s32, 1
        %s567 = scalar_select %p566, %s32, 1
        %s568 = smul.addr %s567, 4
        %s569 = scalar_lea.vmem %s1, %s568
      $region84: #{tpu_custom_call.1} parent=75 // pred_fallthru
        _
      // Predicated region
      $region85: #{tpu_custom_call.1} parent=75 // pred_check
        %p570 = pneg %p111
      $region86: #{tpu_custom_call.1} parent=75 // pred_check_branch
        %572 = sbr.rel (%p570) target = $region88
      $region87: #{tpu_custom_call.1} parent=75 // pred_region
        %p573 = scmp.lt.s32.totalorder %s32, 1
        %s574 = scalar_select %p573, %s32, 1
        %s575 = smul.addr %s574, 4
        %s576 = scalar_lea.vmem %s2, %s575
      $region88: #{tpu_custom_call.1} parent=75 // pred_fallthru
        _
      // Predicated region
      $region89: #{tpu_custom_call.1} parent=75 // pred_check
        %p577 = pneg %p137
      $region90: #{tpu_custom_call.1} parent=75 // pred_check_branch
        %579 = sbr.rel (%p577) target = $region92
      $region91: #{tpu_custom_call.1} parent=75 // pred_region
        %p580 = scmp.lt.s32.totalorder %s32, 1
        %s581 = scalar_select %p580, %s32, 1
        %s582 = scalar_lea.vmem %s3, %s581
      $region92: #{tpu_custom_call.1} parent=75 // pred_fallthru
        _
    $region76: #{tpu_custom_call.1} parent=5 // pred_fallthru
      _
    %p583 = scmp.le.s32.totalorder 1, %s25
    %p584 = scmp.lt.s32.totalorder %s25, 9
    %p585 = pnand %p583, %p584
    %p586 = pneg %p585
    // Predicated region
    $region93: #{tpu_custom_call.1} parent=5 // pred_check
      _
    $region94: #{tpu_custom_call.1} parent=5 // pred_check_branch
      %588 = sbr.rel (%p585) target = $region96
    $region95: #{tpu_custom_call.1} parent=5 // pred_region
      %s589 = ssub.s32 %s25, 1
      %s590 = smul.u32 8, %s35
      %p591 = scmp.lt.s32.totalorder %s34, 1
      %s592 = scalar_select %p591, %s34, 1
      %p593 = scmp.lt.s32.totalorder %s590, 31
      %s594 = scalar_select %p593, %s590, 31
      %s595 = smul.addr %s592, 32
      %s596 = sadd.s32 %s594, %s595
      %s597 = smul.addr %s596, 4
      %s598 = scalar_lea.vmem %s0, %s597
      %p599 = pneg %p65
      %p600 = pneg %p62
      %p601 = scmp.lt.s32.totalorder %s34, 1
      %s602 = scalar_select %p601, %s34, 1
      %s603 = smul.addr %s602, 4
      %s604 = scalar_lea.vmem %s1, %s603
      %p605 = pneg %p91
      %p606 = pneg %p88
      %p607 = scmp.lt.s32.totalorder %s34, 1
      %s608 = scalar_select %p607, %s34, 1
      %s609 = smul.addr %s608, 4
      %s610 = scalar_lea.vmem %s2, %s609
      %p611 = pneg %p117
      %p612 = pneg %p114
      %p613 = scmp.lt.s32.totalorder %s34, 1
      %s614 = scalar_select %p613, %s34, 1
      %s615 = scalar_lea.vmem %s3, %s614
      %p616 = pneg %p143
      %p617 = pneg %p140
      %p618 = pneg %p164
      %p619 = pneg %p161
      %p620 = pneg %p185
      %p621 = pneg %p182
      %p622 = pneg %p206
      %p623 = pneg %p203
      %p624 = pneg %p227
      %p625 = pneg %p224
      %p626 = pneg %p248
      %p627 = pneg %p245
      %p628 = pneg %p269
      %p629 = pneg %p266
      %p630 = pneg %p290
      %p631 = pneg %p287
      %p632 = pneg %p311
      %p633 = pneg %p308
      %p634 = pneg %p332
      %p635 = pneg %p329
      %p636 = pneg %p353
      %p637 = pneg %p350
      %p638 = pneg %p374
      %p639 = pneg %p371
      %p640 = pneg %p395
      %p641 = pneg %p392
      %p642 = pneg %p416
      %p643 = pneg %p413
      %p644 = pneg %p437
      %p645 = pneg %p434
      %p646 = pneg %p458
      %p647 = pneg %p455
      %p648 = pneg %p486
      %p649 = pneg %p483
      %s650 = smul.u32 8, %s35
      %p651 = scmp.lt.s32.totalorder %s34, 1
      %s652 = scalar_select %p651, %s34, 1
      %p653 = scmp.lt.s32.totalorder %s650, 31
      %s654 = scalar_select %p653, %s650, 31
      %s655 = smul.addr %s652, 32
      %s656 = sadd.s32 %s654, %s655
      %s657 = smul.addr %s656, 8
      %s658 = scalar_lea.vmem %s19, %s657
      %s659 = smul.u32 8, %s35
      %p660 = scmp.lt.s32.totalorder %s34, 1
      %s661 = scalar_select %p660, %s34, 1
      %p662 = scmp.lt.s32.totalorder %s659, 31
      %s663 = scalar_select %p662, %s659, 31
      %s664 = smul.addr %s661, 32
      %s665 = sadd.s32 %s663, %s664
      %s666 = smul.addr %s665, 4
      %s667 = scalar_lea.vmem %s0, %s666
      %s668 = smul.u32 8, %s35
      %p669 = scmp.lt.s32.totalorder %s34, 1
      %s670 = scalar_select %p669, %s34, 1
      %s671 = smul.addr %s670, 4
      %s672 = scalar_lea.vmem %s1, %s671
      %p673 = scmp.lt.s32.totalorder %s34, 1
      %s674 = scalar_select %p673, %s34, 1
      %s675 = smul.addr %s674, 4
      %s676 = scalar_lea.vmem %s2, %s675
      %p677 = scmp.lt.s32.totalorder %s34, 1
      %s678 = scalar_select %p677, %s34, 1
      %s679 = scalar_lea.vmem %s3, %s678
      %s680 = smul.u32 8, %s35
      %p681 = scmp.lt.s32.totalorder %s34, 1
      %s682 = scalar_select %p681, %s34, 1
      %p683 = scmp.lt.s32.totalorder %s680, 31
      %s684 = scalar_select %p683, %s680, 31
      %s685 = smul.addr %s682, 32
      %s686 = sadd.s32 %s684, %s685
      %s687 = smul.addr %s686, 8
      %s688 = scalar_lea.vmem %s19, %s687
      %s689 = smul.u32 8, %s35
      %p691 = scmp.eq.s32.totalorder %s35, 0
      // Predicated region
      $region97: #{tpu_custom_call.1} parent=95 // pred_check
        %p692 = pneg %p691
      $region98: #{tpu_custom_call.1} parent=95 // pred_check_branch
        %694 = sbr.rel (%p692) target = $region100
      $region99: #{tpu_custom_call.1} parent=95 // pred_region
        %v695 = vld [vmem:[%s672] sm:$0xf]
        %v696 = vld [vmem:[%s676] sm:$0xf]
        %v697 = vld [vmem:[%s8] sm:$0xf]
        %v698 = vld [vmem:[%s9] sm:$0x1]
        %v700 = vlaneseq
        %v701 = vshrl.u32 %v700, 7
        %v702 = vsub.s32 0, %v701
        %v703 = vrot.slane %v698, %v702
        %vm705 = vcmask 64512
        %v707 = vsel %vm705, %v695, 0
        %vm709 = vcmask 1043456
        %v711 = vsel %vm709, %v697, 0
        %713 = vmatprep.subr.bf16.mxu0 0
        %714 = vmatpush1.bf16.msra.mxu0 %v711
        %715 = vmatprep.subr.bf16.mxu0 0
        %716 = vmatpush1.bf16.msra.mxu0 0
        %717 = vmatprep.subr.bf16.mxu0 0
        %718 = vmatpush1.bf16.msra.mxu0 0
        %719 = vmatprep.subr.bf16.mxu0 0
        %720 = vmatpush1.bf16.msra.mxu0 0
        %721 = vmatprep.subr.bf16.mxu0 0
        %722 = vmatpush1.bf16.msra.mxu0 0
        %723 = vmatprep.subr.bf16.mxu0 0
        %724 = vmatpush1.bf16.msra.mxu0 0
        %725 = vmatprep.subr.bf16.mxu0 0
        %726 = vmatpush1.bf16.msra.mxu0 0
        %727 = vmatprep.subr.bf16.mxu0 0
        %728 = vmatpush1.bf16.msra.mxu0 0
        %729 = vmatprep.subr.bf16.mxu0 0
        %730 = vmatpush1.bf16.msra.mxu0 0
        %731 = vmatprep.subr.bf16.mxu0 0
        %732 = vmatpush1.bf16.msra.mxu0 0
        %733 = vmatprep.subr.bf16.mxu0 0
        %734 = vmatpush1.bf16.msra.mxu0 0
        %735 = vmatprep.subr.bf16.mxu0 0
        %736 = vmatpush1.bf16.msra.mxu0 0
        %737 = vmatprep.subr.bf16.mxu0 0
        %738 = vmatpush1.bf16.msra.mxu0 0
        %739 = vmatprep.subr.bf16.mxu0 0
        %740 = vmatpush1.bf16.msra.mxu0 0
        %741 = vmatprep.subr.bf16.mxu0 0
        %742 = vmatpush1.bf16.msra.mxu0 0
        %743 = vmatprep.subr.bf16.mxu0 0
        %744 = vmatpush1.bf16.msra.mxu0 0
        %745 = vmatprep.mubr.bf16.mxu0 0
        %746 = vmatmul.mubr.bf16.gmra.mrb[0].mxu0 %v707
        %v747 = vpop.f32.mrb[0].mxu0
        %v748 = vadd.f32 %v703, %v747
        %v749 = vpop.f32.mrb[0].mxu0
        %v750 = vpop.f32.mrb[0].mxu0
        %v751 = vpop.f32.mrb[0].mxu0
        %752 = vdwg.mxu0
        %v753 = vmax.f32 %v748, 0.0
        %v754 = vpack.c.bf16 %v753, %v753
        %v755 = vld [vmem:[%s10] sm:$0xf]
        %v756 = vld [vmem:[%s10 + $0x4] sm:$0xf]
        %v757 = vld [vmem:[%s10 + $0x8] sm:$0xf]
        %v758 = vld [vmem:[%s10 + $0xc] sm:$0xf]
        %v759 = vld [vmem:[%s11] sm:$0x1]
        %v761 = vlaneseq
        %v762 = vshrl.u32 %v761, 7
        %v763 = vsub.s32 0, %v762
        %v764 = vrot.slane %v759, %v763
        %v770 = vunpack.c.l.b16 %v755
        %v771 = vunpack.c.l.b16 %v756
        %v772 = vunpack.c.l.b16 %v757
        %v773 = vunpack.c.l.b16 %v758
        %v774 = vpack.c.b16 %v771, %v770
        %v775 = vpack.c.b16 %v773, %v772
        %vm778 = vcmask 261120
        %v780 = vsel %vm778, %v754, 0
        %782 = vmatprep.subr.bf16.mxu0 0
        %783 = vmatpush1.bf16.msra.mxu0 %v774
        %784 = vmatprep.subr.bf16.mxu0 0
        %785 = vmatpush1.bf16.msra.mxu0 %v775
        %786 = vmatprep.subr.bf16.mxu0 0
        %787 = vmatpush1.bf16.msra.mxu0 0
        %788 = vmatprep.subr.bf16.mxu0 0
        %789 = vmatpush1.bf16.msra.mxu0 0
        %790 = vmatprep.subr.bf16.mxu0 0
        %791 = vmatpush1.bf16.msra.mxu0 0
        %792 = vmatprep.subr.bf16.mxu0 0
        %793 = vmatpush1.bf16.msra.mxu0 0
        %794 = vmatprep.subr.bf16.mxu0 0
        %795 = vmatpush1.bf16.msra.mxu0 0
        %796 = vmatprep.subr.bf16.mxu0 0
        %797 = vmatpush1.bf16.msra.mxu0 0
        %798 = vmatprep.subr.bf16.mxu0 0
        %799 = vmatpush1.bf16.msra.mxu0 0
        %800 = vmatprep.subr.bf16.mxu0 0
        %801 = vmatpush1.bf16.msra.mxu0 0
        %802 = vmatprep.subr.bf16.mxu0 0
        %803 = vmatpush1.bf16.msra.mxu0 0
        %804 = vmatprep.subr.bf16.mxu0 0
        %805 = vmatpush1.bf16.msra.mxu0 0
        %806 = vmatprep.subr.bf16.mxu0 0
        %807 = vmatpush1.bf16.msra.mxu0 0
        %808 = vmatprep.subr.bf16.mxu0 0
        %809 = vmatpush1.bf16.msra.mxu0 0
        %810 = vmatprep.subr.bf16.mxu0 0
        %811 = vmatpush1.bf16.msra.mxu0 0
        %812 = vmatprep.subr.bf16.mxu0 0
        %813 = vmatpush1.bf16.msra.mxu0 0
        %814 = vmatprep.mubr.bf16.mxu0 0
        %815 = vmatmul.mubr.bf16.gmra.mrb[0].mxu0 %v780
        %v816 = vpop.f32.mrb[0].mxu0
        %v817 = vadd.f32 %v764, %v816
        %v818 = vpop.f32.mrb[0].mxu0
        %v819 = vpop.f32.mrb[0].mxu0
        %v820 = vpop.f32.mrb[0].mxu0
        %821 = vdwg.mxu0
        %v822 = vmax.f32 %v817, 0.0
        %v823 = vpack.c.bf16 %v822, %v822
        %vm824 = vcmask 257024
        %825 = vst.msk [vmem:[#allocation2] sm:$0xf] %vm824, %v823
        %v826 = vld [vmem:[%s12] sm:$0xf]
        %v827 = vld [vmem:[%s13] sm:$0x1]
        %v829 = vlaneseq
        %v830 = vshrl.u32 %v829, 7
        %v831 = vsub.s32 0, %v830
        %v832 = vrot.slane %v827, %v831
        %v835 = vsel %vm705, %v696, 0
        %v838 = vsel %vm709, %v826, 0
        %840 = vmatprep.subr.bf16.mxu0 0
        %841 = vmatpush1.bf16.msra.mxu0 %v838
        %842 = vmatprep.subr.bf16.mxu0 0
        %843 = vmatpush1.bf16.msra.mxu0 0
        %844 = vmatprep.subr.bf16.mxu0 0
        %845 = vmatpush1.bf16.msra.mxu0 0
        %846 = vmatprep.subr.bf16.mxu0 0
        %847 = vmatpush1.bf16.msra.mxu0 0
        %848 = vmatprep.subr.bf16.mxu0 0
        %849 = vmatpush1.bf16.msra.mxu0 0
        %850 = vmatprep.subr.bf16.mxu0 0
        %851 = vmatpush1.bf16.msra.mxu0 0
        %852 = vmatprep.subr.bf16.mxu0 0
        %853 = vmatpush1.bf16.msra.mxu0 0
        %854 = vmatprep.subr.bf16.mxu0 0
        %855 = vmatpush1.bf16.msra.mxu0 0
        %856 = vmatprep.subr.bf16.mxu0 0
        %857 = vmatpush1.bf16.msra.mxu0 0
        %858 = vmatprep.subr.bf16.mxu0 0
        %859 = vmatpush1.bf16.msra.mxu0 0
        %860 = vmatprep.subr.bf16.mxu0 0
        %861 = vmatpush1.bf16.msra.mxu0 0
        %862 = vmatprep.subr.bf16.mxu0 0
        %863 = vmatpush1.bf16.msra.mxu0 0
        %864 = vmatprep.subr.bf16.mxu0 0
        %865 = vmatpush1.bf16.msra.mxu0 0
        %866 = vmatprep.subr.bf16.mxu0 0
        %867 = vmatpush1.bf16.msra.mxu0 0
        %868 = vmatprep.subr.bf16.mxu0 0
        %869 = vmatpush1.bf16.msra.mxu0 0
        %870 = vmatprep.subr.bf16.mxu0 0
        %871 = vmatpush1.bf16.msra.mxu0 0
        %872 = vmatprep.mubr.bf16.mxu0 0
        %873 = vmatmul.mubr.bf16.gmra.mrb[0].mxu0 %v835
        %v874 = vpop.f32.mrb[0].mxu0
        %v875 = vadd.f32 %v832, %v874
        %v876 = vpop.f32.mrb[0].mxu0
        %v877 = vpop.f32.mrb[0].mxu0
        %v878 = vpop.f32.mrb[0].mxu0
        %879 = vdwg.mxu0
        %v880 = vmax.f32 %v875, 0.0
        %v881 = vpack.c.bf16 %v880, %v880
        %882 = vst.msk [vmem:[#allocation3] sm:$0xf] %vm824, %v881
      $region100: #{tpu_custom_call.1} parent=95 // pred_fallthru
        _
      %v883 = vld [vmem:[%s667] sm:$0xf]
      %v884 = vld [vmem:[%s667 + $0x4] sm:$0xf]
      %v885 = vld [vmem:[%s667 + $0x8] sm:$0xf]
      %v886 = vld [vmem:[%s667 + $0xc] sm:$0xf]
      %v887 = vld [vmem:[%s667 + $0x10] sm:$0xf]
      %v888 = vld [vmem:[%s667 + $0x14] sm:$0xf]
      %v889 = vld [vmem:[%s667 + $0x18] sm:$0xf]
      %v890 = vld [vmem:[%s667 + $0x1c] sm:$0xf]
      %v891 = vld [vmem:[%s679] sm:$0x1]
      %v892 = vld [vmem:[%s4] sm:$0xf]
      %v893 = vld [vmem:[%s5] sm:$0x1]
      %v895 = vlaneseq
      %v896 = vshrl.u32 %v895, 7
      %v897 = vsub.s32 0, %v896
      %v898 = vrot.slane %v893, %v897
      %v908 = vunpack.c.l.b16 %v883
      %v909 = vunpack.c.l.b16 %v884
      %v910 = vunpack.c.l.b16 %v885
      %v911 = vunpack.c.l.b16 %v886
      %v912 = vunpack.c.l.b16 %v887
      %v913 = vunpack.c.l.b16 %v888
      %v914 = vunpack.c.l.b16 %v889
      %v915 = vunpack.c.l.b16 %v890
      %v916 = vpack.c.b16 %v909, %v908
      %v917 = vpack.c.b16 %v911, %v910
      %v918 = vpack.c.b16 %v913, %v912
      %v919 = vpack.c.b16 %v915, %v914
      %vm920 = vcmask 64512
      %v922 = vsel %vm920, %v916, 0
      %v925 = vsel %vm920, %v917, 0
      %v928 = vsel %vm920, %v918, 0
      %v931 = vsel %vm920, %v919, 0
      %vm933 = vcmask 1043456
      %v935 = vsel %vm933, %v892, 0
      %937 = vmatprep.subr.bf16.mxu0 0
      %938 = vmatpush1.bf16.msra.mxu0 %v935
      %939 = vmatprep.subr.bf16.mxu0 0
      %940 = vmatpush1.bf16.msra.mxu0 0
      %941 = vmatprep.subr.bf16.mxu0 0
      %942 = vmatpush1.bf16.msra.mxu0 0
      %943 = vmatprep.subr.bf16.mxu0 0
      %944 = vmatpush1.bf16.msra.mxu0 0
      %945 = vmatprep.subr.bf16.mxu0 0
      %946 = vmatpush1.bf16.msra.mxu0 0
      %947 = vmatprep.subr.bf16.mxu0 0
      %948 = vmatpush1.bf16.msra.mxu0 0
      %949 = vmatprep.subr.bf16.mxu0 0
      %950 = vmatpush1.bf16.msra.mxu0 0
      %951 = vmatprep.subr.bf16.mxu0 0
      %952 = vmatpush1.bf16.msra.mxu0 0
      %953 = vmatprep.subr.bf16.mxu0 0
      %954 = vmatpush1.bf16.msra.mxu0 0
      %955 = vmatprep.subr.bf16.mxu0 0
      %956 = vmatpush1.bf16.msra.mxu0 0
      %957 = vmatprep.subr.bf16.mxu0 0
      %958 = vmatpush1.bf16.msra.mxu0 0
      %959 = vmatprep.subr.bf16.mxu0 0
      %960 = vmatpush1.bf16.msra.mxu0 0
      %961 = vmatprep.subr.bf16.mxu0 0
      %962 = vmatpush1.bf16.msra.mxu0 0
      %963 = vmatprep.subr.bf16.mxu0 0
      %964 = vmatpush1.bf16.msra.mxu0 0
      %965 = vmatprep.subr.bf16.mxu0 0
      %966 = vmatpush1.bf16.msra.mxu0 0
      %967 = vmatprep.subr.bf16.mxu0 0
      %968 = vmatpush1.bf16.msra.mxu0 0
      %969 = vmatprep.mubr.bf16.mxu0 0
      %970 = vmatmul.mubr.bf16.gmra.mrb[0].mxu0 %v922
      %v971 = vpop.f32.mrb[0].mxu0
      %v972 = vadd.f32 %v898, %v971
      %v973 = vpop.f32.mrb[0].mxu0
      %v974 = vpop.f32.mrb[0].mxu0
      %v975 = vadd.f32 %v898, %v974
      %v976 = vpop.f32.mrb[0].mxu0
      %977 = vmatprep.mubr.bf16.mxu0 0
      %978 = vmatmul.mubr.bf16.gmra.mrb[0].mxu0 %v925
      %v979 = vpop.f32.mrb[0].mxu0
      %v980 = vadd.f32 %v898, %v979
      %v981 = vpop.f32.mrb[0].mxu0
      %v982 = vpop.f32.mrb[0].mxu0
      %v983 = vadd.f32 %v898, %v982
      %v984 = vpop.f32.mrb[0].mxu0
      %985 = vmatprep.mubr.bf16.mxu0 0
      %986 = vmatmul.mubr.bf16.gmra.mrb[0].mxu0 %v928
      %v987 = vpop.f32.mrb[0].mxu0
      %v988 = vadd.f32 %v898, %v987
      %v989 = vpop.f32.mrb[0].mxu0
      %v990 = vpop.f32.mrb[0].mxu0
      %v991 = vadd.f32 %v898, %v990
      %v992 = vpop.f32.mrb[0].mxu0
      %993 = vmatprep.mubr.bf16.mxu0 0
      %994 = vmatmul.mubr.bf16.gmra.mrb[0].mxu0 %v931
      %v995 = vpop.f32.mrb[0].mxu0
      %v996 = vadd.f32 %v898, %v995
      %v997 = vpop.f32.mrb[0].mxu0
      %v998 = vpop.f32.mrb[0].mxu0
      %v999 = vadd.f32 %v898, %v998
      %v1000 = vpop.f32.mrb[0].mxu0
      %1001 = vdwg.mxu0
      %v1002 = vmax.f32 %v972, 0.0
      %v1003 = vmax.f32 %v975, 0.0
      %v1004 = vmax.f32 %v980, 0.0
      %v1005 = vmax.f32 %v983, 0.0
      %v1006 = vmax.f32 %v988, 0.0
      %v1007 = vmax.f32 %v991, 0.0
      %v1008 = vmax.f32 %v996, 0.0
      %v1009 = vmax.f32 %v999, 0.0
      %v1010 = vpack.c.bf16 %v1003, %v1002
      %v1011 = vpack.c.bf16 %v1005, %v1004
      %v1012 = vpack.c.bf16 %v1007, %v1006
      %v1013 = vpack.c.bf16 %v1009, %v1008
      %v1014 = vld [vmem:[%s6] sm:$0xf]
      %v1015 = vld [vmem:[%s6 + $0x4] sm:$0xf]
      %v1016 = vld [vmem:[%s6 + $0x8] sm:$0xf]
      %v1017 = vld [vmem:[%s6 + $0xc] sm:$0xf]
      %v1018 = vld [vmem:[%s7] sm:$0x1]
      %v1020 = vlaneseq
      %v1021 = vshrl.u32 %v1020, 7
      %v1022 = vsub.s32 0, %v1021
      %v1023 = vrot.slane %v1018, %v1022
      %v1029 = vunpack.c.l.b16 %v1014
      %v1030 = vunpack.c.l.b16 %v1015
      %v1031 = vunpack.c.l.b16 %v1016
      %v1032 = vunpack.c.l.b16 %v1017
      %v1033 = vpack.c.b16 %v1030, %v1029
      %v1034 = vpack.c.b16 %v1032, %v1031
      %vm1037 = vcmask 261120
      %v1039 = vsel %vm1037, %v1010, 0
      %v1042 = vsel %vm1037, %v1011, 0
      %v1045 = vsel %vm1037, %v1012, 0
      %v1048 = vsel %vm1037, %v1013, 0
      %1050 = vmatprep.subr.bf16.mxu0 0
      %1051 = vmatpush1.bf16.msra.mxu0 %v1033
      %1052 = vmatprep.subr.bf16.mxu0 0
      %1053 = vmatpush1.bf16.msra.mxu0 %v1034
      %1054 = vmatprep.subr.bf16.mxu0 0
      %1055 = vmatpush1.bf16.msra.mxu0 0
      %1056 = vmatprep.subr.bf16.mxu0 0
      %1057 = vmatpush1.bf16.msra.mxu0 0
      %1058 = vmatprep.subr.bf16.mxu0 0
      %1059 = vmatpush1.bf16.msra.mxu0 0
      %1060 = vmatprep.subr.bf16.mxu0 0
      %1061 = vmatpush1.bf16.msra.mxu0 0
      %1062 = vmatprep.subr.bf16.mxu0 0
      %1063 = vmatpush1.bf16.msra.mxu0 0
      %1064 = vmatprep.subr.bf16.mxu0 0
      %1065 = vmatpush1.bf16.msra.mxu0 0
      %1066 = vmatprep.subr.bf16.mxu0 0
      %1067 = vmatpush1.bf16.msra.mxu0 0
      %1068 = vmatprep.subr.bf16.mxu0 0
      %1069 = vmatpush1.bf16.msra.mxu0 0
      %1070 = vmatprep.subr.bf16.mxu0 0
      %1071 = vmatpush1.bf16.msra.mxu0 0
      %1072 = vmatprep.subr.bf16.mxu0 0
      %1073 = vmatpush1.bf16.msra.mxu0 0
      %1074 = vmatprep.subr.bf16.mxu0 0
      %1075 = vmatpush1.bf16.msra.mxu0 0
      %1076 = vmatprep.subr.bf16.mxu0 0
      %1077 = vmatpush1.bf16.msra.mxu0 0
      %1078 = vmatprep.subr.bf16.mxu0 0
      %1079 = vmatpush1.bf16.msra.mxu0 0
      %1080 = vmatprep.subr.bf16.mxu0 0
      %1081 = vmatpush1.bf16.msra.mxu0 0
      %1082 = vmatprep.mubr.bf16.mxu0 0
      %1083 = vmatmul.mubr.bf16.gmra.mrb[0].mxu0 %v1039
      %v1084 = vpop.f32.mrb[0].mxu0
      %v1085 = vadd.f32 %v1023, %v1084
      %v1086 = vpop.f32.mrb[0].mxu0
      %v1087 = vpop.f32.mrb[0].mxu0
      %v1088 = vadd.f32 %v1023, %v1087
      %v1089 = vpop.f32.mrb[0].mxu0
      %1090 = vmatprep.mubr.bf16.mxu0 0
      %1091 = vmatmul.mubr.bf16.gmra.mrb[0].mxu0 %v1042
      %v1092 = vpop.f32.mrb[0].mxu0
      %v1093 = vadd.f32 %v1023, %v1092
      %v1094 = vpop.f32.mrb[0].mxu0
      %v1095 = vpop.f32.mrb[0].mxu0
      %v1096 = vadd.f32 %v1023, %v1095
      %v1097 = vpop.f32.mrb[0].mxu0
      %1098 = vmatprep.mubr.bf16.mxu0 0
      %1099 = vmatmul.mubr.bf16.gmra.mrb[0].mxu0 %v1045
      %v1100 = vpop.f32.mrb[0].mxu0
      %v1101 = vadd.f32 %v1023, %v1100
      %v1102 = vpop.f32.mrb[0].mxu0
      %v1103 = vpop.f32.mrb[0].mxu0
      %v1104 = vadd.f32 %v1023, %v1103
      %v1105 = vpop.f32.mrb[0].mxu0
      %1106 = vmatprep.mubr.bf16.mxu0 0
      %1107 = vmatmul.mubr.bf16.gmra.mrb[0].mxu0 %v1048
      %v1108 = vpop.f32.mrb[0].mxu0
      %v1109 = vadd.f32 %v1023, %v1108
      %v1110 = vpop.f32.mrb[0].mxu0
      %v1111 = vpop.f32.mrb[0].mxu0
      %v1112 = vadd.f32 %v1023, %v1111
      %v1113 = vpop.f32.mrb[0].mxu0
      %1114 = vdwg.mxu0
      %v1115 = vmax.f32 %v1085, 0.0
      %v1116 = vmax.f32 %v1088, 0.0
      %v1117 = vmax.f32 %v1093, 0.0
      %v1118 = vmax.f32 %v1096, 0.0
      %v1119 = vmax.f32 %v1101, 0.0
      %v1120 = vmax.f32 %v1104, 0.0
      %v1121 = vmax.f32 %v1109, 0.0
      %v1122 = vmax.f32 %v1112, 0.0
      %v1123 = vpack.c.bf16 %v1116, %v1115
      %v1124 = vpack.c.bf16 %v1118, %v1117
      %v1125 = vpack.c.bf16 %v1120, %v1119
      %v1126 = vpack.c.bf16 %v1122, %v1121
      %v1127 = vld [vmem:[#allocation2] sm:$0xf]
      %v1129 = vsel %vm1037, %v1123, 0
      %v1132 = vsel %vm1037, %v1124, 0
      %v1135 = vsel %vm1037, %v1125, 0
      %v1138 = vsel %vm1037, %v1126, 0
      %v1141 = vsel %vm1037, %v1127, 0
      %1143 = vmatprep.subr.bf16.mxu0 0
      %1144 = vmatpush1.bf16.xpose.msra.mxu0 %v1141
      %1145 = vmatprep.subr.bf16.mxu0 0
      %1146 = vmatpush1.bf16.xpose.msra.mxu0 0
      %1147 = vmatprep.subr.bf16.mxu0 0
      %1148 = vmatpush1.bf16.xpose.msra.mxu0 0
      %1149 = vmatprep.subr.bf16.mxu0 0
      %1150 = vmatpush1.bf16.xpose.msra.mxu0 0
      %1151 = vmatprep.subr.bf16.mxu0 0
      %1152 = vmatpush1.bf16.xpose.msra.mxu0 0
      %1153 = vmatprep.subr.bf16.mxu0 0
      %1154 = vmatpush1.bf16.xpose.msra.mxu0 0
      %1155 = vmatprep.subr.bf16.mxu0 0
      %1156 = vmatpush1.bf16.xpose.msra.mxu0 0
      %1157 = vmatprep.subr.bf16.mxu0 0
      %1158 = vmatpush1.bf16.xpose.msra.mxu0 0
      %1159 = vmatprep.subr.bf16.mxu0 0
      %1160 = vmatpush1.bf16.xpose.msra.mxu0 0
      %1161 = vmatprep.subr.bf16.mxu0 0
      %1162 = vmatpush1.bf16.xpose.msra.mxu0 0
      %1163 = vmatprep.subr.bf16.mxu0 0
      %1164 = vmatpush1.bf16.xpose.msra.mxu0 0
      %1165 = vmatprep.subr.bf16.mxu0 0
      %1166 = vmatpush1.bf16.xpose.msra.mxu0 0
      %1167 = vmatprep.subr.bf16.mxu0 0
      %1168 = vmatpush1.bf16.xpose.msra.mxu0 0
      %1169 = vmatprep.subr.bf16.mxu0 0
      %1170 = vmatpush1.bf16.xpose.msra.mxu0 0
      %1171 = vmatprep.subr.bf16.mxu0 0
      %1172 = vmatpush1.bf16.xpose.msra.mxu0 0
      %1173 = vmatprep.subr.bf16.mxu0 0
      %1174 = vmatpush1.bf16.xpose.msra.mxu0 0
      %1175 = vmatprep.mubr.bf16.mxu0 0
      %1176 = vmatmul.mubr.bf16.gmra.mrb[0].mxu0 %v1129
      %v1177 = vpop.f32.mrb[0].mxu0
      %v1178 = vadd.f32 0.0, %v1177
      %v1179 = vpop.f32.mrb[0].mxu0
      %v1180 = vpop.f32.mrb[0].mxu0
      %v1181 = vadd.f32 0.0, %v1180
      %v1182 = vpop.f32.mrb[0].mxu0
      %1183 = vmatprep.mubr.bf16.mxu0 0
      %1184 = vmatmul.mubr.bf16.gmra.mrb[0].mxu0 %v1132
      %v1185 = vpop.f32.mrb[0].mxu0
      %v1186 = vadd.f32 0.0, %v1185
      %v1187 = vpop.f32.mrb[0].mxu0
      %v1188 = vpop.f32.mrb[0].mxu0
      %v1189 = vadd.f32 0.0, %v1188
      %v1190 = vpop.f32.mrb[0].mxu0
      %1191 = vmatprep.mubr.bf16.mxu0 0
      %1192 = vmatmul.mubr.bf16.gmra.mrb[0].mxu0 %v1135
      %v1193 = vpop.f32.mrb[0].mxu0
      %v1194 = vadd.f32 0.0, %v1193
      %v1195 = vpop.f32.mrb[0].mxu0
      %v1196 = vpop.f32.mrb[0].mxu0
      %v1197 = vadd.f32 0.0, %v1196
      %v1198 = vpop.f32.mrb[0].mxu0
      %1199 = vmatprep.mubr.bf16.mxu0 0
      %1200 = vmatmul.mubr.bf16.gmra.mrb[0].mxu0 %v1138
      %v1201 = vpop.f32.mrb[0].mxu0
      %v1202 = vadd.f32 0.0, %v1201
      %v1203 = vpop.f32.mrb[0].mxu0
      %v1204 = vpop.f32.mrb[0].mxu0
      %v1205 = vadd.f32 0.0, %v1204
      %v1206 = vpop.f32.mrb[0].mxu0
      %1207 = vdwg.mxu0
      %vm1208 = vcmp.gt.f32.partialorder %v891, 0.0
      %v1209 = vsel %vm1208, 1, 0
      %v1210 = vlaneseq
      %v1211 = vshrl.u32 %v1210, 7
      %v1212 = vsub.s32 0, %v1211
      %v1213 = vrot.slane %v1209, %v1212
      %vm1214 = vcmp.eq.s32.totalorder %v1213, 1
      %v1215 = vsel %vm1214, %v1178, -10000000.0
      %v1216 = vsel %vm1214, %v1181, -10000000.0
      %v1217 = vsel %vm1214, %v1186, -10000000.0
      %v1218 = vsel %vm1214, %v1189, -10000000.0
      %v1219 = vsel %vm1214, %v1194, -10000000.0
      %v1220 = vsel %vm1214, %v1197, -10000000.0
      %v1221 = vsel %vm1214, %v1202, -10000000.0
      %v1222 = vsel %vm1214, %v1205, -10000000.0
      %v1223 = vsel %vm920, %v1215, -inf
      %1224 = vmax.xlane.f32.xlu0 %v1223
      %v1225 = vpop.xlane.xlu0 %1224
      %v1226 = vsel %vm920, %v1216, -inf
      %1227 = vmax.xlane.f32.xlu0 %v1226
      %v1228 = vpop.xlane.xlu0 %1227
      %v1229 = vsel %vm920, %v1217, -inf
      %1230 = vmax.xlane.f32.xlu0 %v1229
      %v1231 = vpop.xlane.xlu0 %1230
      %v1232 = vsel %vm920, %v1218, -inf
      %1233 = vmax.xlane.f32.xlu0 %v1232
      %v1234 = vpop.xlane.xlu0 %1233
      %v1235 = vsel %vm920, %v1219, -inf
      %1236 = vmax.xlane.f32.xlu0 %v1235
      %v1237 = vpop.xlane.xlu0 %1236
      %v1238 = vsel %vm920, %v1220, -inf
      %1239 = vmax.xlane.f32.xlu0 %v1238
      %v1240 = vpop.xlane.xlu0 %1239
      %v1241 = vsel %vm920, %v1221, -inf
      %1242 = vmax.xlane.f32.xlu0 %v1241
      %v1243 = vpop.xlane.xlu0 %1242
      %v1244 = vsel %vm920, %v1222, -inf
      %1245 = vmax.xlane.f32.xlu0 %v1244
      %v1246 = vpop.xlane.xlu0 %1245
      %v1247 = vsub.f32 %v1215, %v1225
      %v1248 = vsub.f32 %v1216, %v1228
      %v1249 = vsub.f32 %v1217, %v1231
      %v1250 = vsub.f32 %v1218, %v1234
      %v1251 = vsub.f32 %v1219, %v1237
      %v1252 = vsub.f32 %v1220, %v1240
      %v1253 = vsub.f32 %v1221, %v1243
      %v1254 = vsub.f32 %v1222, %v1246
      %v1255 = vmul.f32 %v1247, 1.442695
      %v1256 = vpow.pop %v1255
      %v1257 = vmul.f32 %v1248, 1.442695
      %v1258 = vpow.pop %v1257
      %v1259 = vmul.f32 %v1249, 1.442695
      %v1260 = vpow.pop %v1259
      %v1261 = vmul.f32 %v1250, 1.442695
      %v1262 = vpow.pop %v1261
      %v1263 = vmul.f32 %v1251, 1.442695
      %v1264 = vpow.pop %v1263
      %v1265 = vmul.f32 %v1252, 1.442695
      %v1266 = vpow.pop %v1265
      %v1267 = vmul.f32 %v1253, 1.442695
      %v1268 = vpow.pop %v1267
      %v1269 = vmul.f32 %v1254, 1.442695
      %v1270 = vpow.pop %v1269
      %v1271 = vsel %vm920, %v1256, 0.0
      %1272 = vadd.xlane.f32.xlu0 %v1271
      %v1273 = vpop.xlane.xlu0 %1272
      %v1274 = vsel %vm920, %v1258, 0.0
      %1275 = vadd.xlane.f32.xlu0 %v1274
      %v1276 = vpop.xlane.xlu0 %1275
      %v1277 = vsel %vm920, %v1260, 0.0
      %1278 = vadd.xlane.f32.xlu0 %v1277
      %v1279 = vpop.xlane.xlu0 %1278
      %v1280 = vsel %vm920, %v1262, 0.0
      %1281 = vadd.xlane.f32.xlu0 %v1280
      %v1282 = vpop.xlane.xlu0 %1281
      %v1283 = vsel %vm920, %v1264, 0.0
      %1284 = vadd.xlane.f32.xlu0 %v1283
      %v1285 = vpop.xlane.xlu0 %1284
      %v1286 = vsel %vm920, %v1266, 0.0
      %1287 = vadd.xlane.f32.xlu0 %v1286
      %v1288 = vpop.xlane.xlu0 %1287
      %v1289 = vsel %vm920, %v1268, 0.0
      %1290 = vadd.xlane.f32.xlu0 %v1289
      %v1291 = vpop.xlane.xlu0 %1290
      %v1292 = vsel %vm920, %v1270, 0.0
      %1293 = vadd.xlane.f32.xlu0 %v1292
      %v1294 = vpop.xlane.xlu0 %1293
      %v1295 = vrcp.pop %v1273
      %v1296 = vrcp.pop %v1276
      %v1297 = vrcp.pop %v1279
      %v1298 = vrcp.pop %v1282
      %v1299 = vrcp.pop %v1285
      %v1300 = vrcp.pop %v1288
      %v1301 = vrcp.pop %v1291
      %v1302 = vrcp.pop %v1294
      %v1303 = vmul.f32 %v1256, %v1295
      %v1304 = vmul.f32 %v1258, %v1296
      %v1305 = vmul.f32 %v1260, %v1297
      %v1306 = vmul.f32 %v1262, %v1298
      %v1307 = vmul.f32 %v1264, %v1299
      %v1308 = vmul.f32 %v1266, %v1300
      %v1309 = vmul.f32 %v1268, %v1301
      %v1310 = vmul.f32 %v1270, %v1302
      %v1311 = vpack.c.bf16 %v1304, %v1303
      %v1312 = vpack.c.bf16 %v1306, %v1305
      %v1313 = vpack.c.bf16 %v1308, %v1307
      %v1314 = vpack.c.bf16 %v1310, %v1309
      %v1315 = vld [vmem:[#allocation3] sm:$0xf]
      %v1317 = vsel %vm920, %v1311, 0
      %v1320 = vsel %vm920, %v1312, 0
      %v1323 = vsel %vm920, %v1313, 0
      %v1326 = vsel %vm920, %v1314, 0
      %v1329 = vsel %vm933, %v1315, 0
      %1331 = vmatprep.subr.bf16.mxu0 0
      %1332 = vmatpush1.bf16.msra.mxu0 %v1329
      %1333 = vmatprep.subr.bf16.mxu0 0
      %1334 = vmatpush1.bf16.msra.mxu0 0
      %1335 = vmatprep.subr.bf16.mxu0 0
      %1336 = vmatpush1.bf16.msra.mxu0 0
      %1337 = vmatprep.subr.bf16.mxu0 0
      %1338 = vmatpush1.bf16.msra.mxu0 0
      %1339 = vmatprep.subr.bf16.mxu0 0
      %1340 = vmatpush1.bf16.msra.mxu0 0
      %1341 = vmatprep.subr.bf16.mxu0 0
      %1342 = vmatpush1.bf16.msra.mxu0 0
      %1343 = vmatprep.subr.bf16.mxu0 0
      %1344 = vmatpush1.bf16.msra.mxu0 0
      %1345 = vmatprep.subr.bf16.mxu0 0
      %1346 = vmatpush1.bf16.msra.mxu0 0
      %1347 = vmatprep.subr.bf16.mxu0 0
      %1348 = vmatpush1.bf16.msra.mxu0 0
      %1349 = vmatprep.subr.bf16.mxu0 0
      %1350 = vmatpush1.bf16.msra.mxu0 0
      %1351 = vmatprep.subr.bf16.mxu0 0
      %1352 = vmatpush1.bf16.msra.mxu0 0
      %1353 = vmatprep.subr.bf16.mxu0 0
      %1354 = vmatpush1.bf16.msra.mxu0 0
      %1355 = vmatprep.subr.bf16.mxu0 0
      %1356 = vmatpush1.bf16.msra.mxu0 0
      %1357 = vmatprep.subr.bf16.mxu0 0
      %1358 = vmatpush1.bf16.msra.mxu0 0
      %1359 = vmatprep.subr.bf16.mxu0 0
      %1360 = vmatpush1.bf16.msra.mxu0 0
      %1361 = vmatprep.subr.bf16.mxu0 0
      %1362 = vmatpush1.bf16.msra.mxu0 0
      %1363 = vmatprep.mubr.bf16.mxu0 0
      %1364 = vmatmul.mubr.bf16.gmra.mrb[0].mxu0 %v1317
      %v1365 = vpop.f32.mrb[0].mxu0
      %v1366 = vadd.f32 0.0, %v1365
      %v1367 = vpop.f32.mrb[0].mxu0
      %v1368 = vpop.f32.mrb[0].mxu0
      %v1369 = vadd.f32 0.0, %v1368
      %v1370 = vpop.f32.mrb[0].mxu0
      %1371 = vmatprep.mubr.bf16.mxu0 0
      %1372 = vmatmul.mubr.bf16.gmra.mrb[0].mxu0 %v1320
      %v1373 = vpop.f32.mrb[0].mxu0
      %v1374 = vadd.f32 0.0, %v1373
      %v1375 = vpop.f32.mrb[0].mxu0
      %v1376 = vpop.f32.mrb[0].mxu0
      %v1377 = vadd.f32 0.0, %v1376
      %v1378 = vpop.f32.mrb[0].mxu0
      %1379 = vmatprep.mubr.bf16.mxu0 0
      %1380 = vmatmul.mubr.bf16.gmra.mrb[0].mxu0 %v1323
      %v1381 = vpop.f32.mrb[0].mxu0
      %v1382 = vadd.f32 0.0, %v1381
      %v1383 = vpop.f32.mrb[0].mxu0
      %v1384 = vpop.f32.mrb[0].mxu0
      %v1385 = vadd.f32 0.0, %v1384
      %v1386 = vpop.f32.mrb[0].mxu0
      %1387 = vmatprep.mubr.bf16.mxu0 0
      %1388 = vmatmul.mubr.bf16.gmra.mrb[0].mxu0 %v1326
      %v1389 = vpop.f32.mrb[0].mxu0
      %v1390 = vadd.f32 0.0, %v1389
      %v1391 = vpop.f32.mrb[0].mxu0
      %v1392 = vpop.f32.mrb[0].mxu0
      %v1393 = vadd.f32 0.0, %v1392
      %v1394 = vpop.f32.mrb[0].mxu0
      %1395 = vdwg.mxu0
      %v1396 = vpack.c.bf16 %v1369, %v1366
      %v1397 = vpack.c.bf16 %v1377, %v1374
      %v1398 = vpack.c.bf16 %v1385, %v1382
      %v1399 = vpack.c.bf16 %v1393, %v1390
      %v1400 = vld [vmem:[%s14] sm:$0xf]
      %v1401 = vld [vmem:[%s14 + $0x4] sm:$0xf]
      %v1402 = vld [vmem:[%s14 + $0x8] sm:$0xf]
      %v1403 = vld [vmem:[%s14 + $0xc] sm:$0xf]
      %v1404 = vld [vmem:[%s15] sm:$0x1]
      %v1406 = vlaneseq
      %v1407 = vshrl.u32 %v1406, 7
      %v1408 = vsub.s32 0, %v1407
      %v1409 = vrot.slane %v1404, %v1408
      %v1415 = vunpack.c.l.b16 %v1400
      %v1416 = vunpack.c.l.b16 %v1401
      %v1417 = vunpack.c.l.b16 %v1402
      %v1418 = vunpack.c.l.b16 %v1403
      %v1419 = vpack.c.b16 %v1416, %v1415
      %v1420 = vpack.c.b16 %v1418, %v1417
      %v1424 = vsel %vm1037, %v1396, 0
      %v1427 = vsel %vm1037, %v1397, 0
      %v1430 = vsel %vm1037, %v1398, 0
      %v1433 = vsel %vm1037, %v1399, 0
      %1435 = vmatprep.subr.bf16.mxu0 0
      %1436 = vmatpush1.bf16.msra.mxu0 %v1419
      %1437 = vmatprep.subr.bf16.mxu0 0
      %1438 = vmatpush1.bf16.msra.mxu0 %v1420
      %1439 = vmatprep.subr.bf16.mxu0 0
      %1440 = vmatpush1.bf16.msra.mxu0 0
      %1441 = vmatprep.subr.bf16.mxu0 0
      %1442 = vmatpush1.bf16.msra.mxu0 0
      %1443 = vmatprep.subr.bf16.mxu0 0
      %1444 = vmatpush1.bf16.msra.mxu0 0
      %1445 = vmatprep.subr.bf16.mxu0 0
      %1446 = vmatpush1.bf16.msra.mxu0 0
      %1447 = vmatprep.subr.bf16.mxu0 0
      %1448 = vmatpush1.bf16.msra.mxu0 0
      %1449 = vmatprep.subr.bf16.mxu0 0
      %1450 = vmatpush1.bf16.msra.mxu0 0
      %1451 = vmatprep.subr.bf16.mxu0 0
      %1452 = vmatpush1.bf16.msra.mxu0 0
      %1453 = vmatprep.subr.bf16.mxu0 0
      %1454 = vmatpush1.bf16.msra.mxu0 0
      %1455 = vmatprep.subr.bf16.mxu0 0
      %1456 = vmatpush1.bf16.msra.mxu0 0
      %1457 = vmatprep.subr.bf16.mxu0 0
      %1458 = vmatpush1.bf16.msra.mxu0 0
      %1459 = vmatprep.subr.bf16.mxu0 0
      %1460 = vmatpush1.bf16.msra.mxu0 0
      %1461 = vmatprep.subr.bf16.mxu0 0
      %1462 = vmatpush1.bf16.msra.mxu0 0
      %1463 = vmatprep.subr.bf16.mxu0 0
      %1464 = vmatpush1.bf16.msra.mxu0 0
      %1465 = vmatprep.subr.bf16.mxu0 0
      %1466 = vmatpush1.bf16.msra.mxu0 0
      %1467 = vmatprep.mubr.bf16.mxu0 0
      %1468 = vmatmul.mubr.bf16.gmra.mrb[0].mxu0 %v1424
      %v1469 = vpop.f32.mrb[0].mxu0
      %v1470 = vadd.f32 %v1409, %v1469
      %v1471 = vpop.f32.mrb[0].mxu0
      %v1472 = vpop.f32.mrb[0].mxu0
      %v1473 = vadd.f32 %v1409, %v1472
      %v1474 = vpop.f32.mrb[0].mxu0
      %1475 = vmatprep.mubr.bf16.mxu0 0
      %1476 = vmatmul.mubr.bf16.gmra.mrb[0].mxu0 %v1427
      %v1477 = vpop.f32.mrb[0].mxu0
      %v1478 = vadd.f32 %v1409, %v1477
      %v1479 = vpop.f32.mrb[0].mxu0
      %v1480 = vpop.f32.mrb[0].mxu0
      %v1481 = vadd.f32 %v1409, %v1480
      %v1482 = vpop.f32.mrb[0].mxu0
      %1483 = vmatprep.mubr.bf16.mxu0 0
      %1484 = vmatmul.mubr.bf16.gmra.mrb[0].mxu0 %v1430
      %v1485 = vpop.f32.mrb[0].mxu0
      %v1486 = vadd.f32 %v1409, %v1485
      %v1487 = vpop.f32.mrb[0].mxu0
      %v1488 = vpop.f32.mrb[0].mxu0
      %v1489 = vadd.f32 %v1409, %v1488
      %v1490 = vpop.f32.mrb[0].mxu0
      %1491 = vmatprep.mubr.bf16.mxu0 0
      %1492 = vmatmul.mubr.bf16.gmra.mrb[0].mxu0 %v1433
      %v1493 = vpop.f32.mrb[0].mxu0
      %v1494 = vadd.f32 %v1409, %v1493
      %v1495 = vpop.f32.mrb[0].mxu0
      %v1496 = vpop.f32.mrb[0].mxu0
      %v1497 = vadd.f32 %v1409, %v1496
      %v1498 = vpop.f32.mrb[0].mxu0
      %1499 = vdwg.mxu0
      %v1500 = vmax.f32 %v1470, 0.0
      %v1501 = vmax.f32 %v1473, 0.0
      %v1502 = vmax.f32 %v1478, 0.0
      %v1503 = vmax.f32 %v1481, 0.0
      %v1504 = vmax.f32 %v1486, 0.0
      %v1505 = vmax.f32 %v1489, 0.0
      %v1506 = vmax.f32 %v1494, 0.0
      %v1507 = vmax.f32 %v1497, 0.0
      %v1508 = vpack.c.bf16 %v1501, %v1500
      %v1509 = vpack.c.bf16 %v1503, %v1502
      %v1510 = vpack.c.bf16 %v1505, %v1504
      %v1511 = vpack.c.bf16 %v1507, %v1506
      %v1512 = vld [vmem:[%s16] sm:$0xf]
      %v1513 = vld [vmem:[%s17] sm:$0xf]
      %v1515 = vsel %vm933, %v1513, 0
      %1517 = vmatprep.subr.bf16.mxu0 0
      %1518 = vmatpush1.bf16.msra.mxu0 %v1515
      %1519 = vmatprep.subr.bf16.mxu0 0
      %1520 = vmatpush1.bf16.msra.mxu0 0
      %1521 = vmatprep.subr.bf16.mxu0 0
      %1522 = vmatpush1.bf16.msra.mxu0 0
      %1523 = vmatprep.subr.bf16.mxu0 0
      %1524 = vmatpush1.bf16.msra.mxu0 0
      %1525 = vmatprep.subr.bf16.mxu0 0
      %1526 = vmatpush1.bf16.msra.mxu0 0
      %1527 = vmatprep.subr.bf16.mxu0 0
      %1528 = vmatpush1.bf16.msra.mxu0 0
      %1529 = vmatprep.subr.bf16.mxu0 0
      %1530 = vmatpush1.bf16.msra.mxu0 0
      %1531 = vmatprep.subr.bf16.mxu0 0
      %1532 = vmatpush1.bf16.msra.mxu0 0
      %1533 = vmatprep.subr.bf16.mxu0 0
      %1534 = vmatpush1.bf16.msra.mxu0 0
      %1535 = vmatprep.subr.bf16.mxu0 0
      %1536 = vmatpush1.bf16.msra.mxu0 0
      %1537 = vmatprep.subr.bf16.mxu0 0
      %1538 = vmatpush1.bf16.msra.mxu0 0
      %1539 = vmatprep.subr.bf16.mxu0 0
      %1540 = vmatpush1.bf16.msra.mxu0 0
      %1541 = vmatprep.subr.bf16.mxu0 0
      %1542 = vmatpush1.bf16.msra.mxu0 0
      %1543 = vmatprep.subr.bf16.mxu0 0
      %1544 = vmatpush1.bf16.msra.mxu0 0
      %1545 = vmatprep.subr.bf16.mxu0 0
      %1546 = vmatpush1.bf16.msra.mxu0 0
      %1547 = vmatprep.subr.bf16.mxu0 0
      %1548 = vmatpush1.bf16.msra.mxu0 0
      %1549 = vmatprep.mubr.bf16.mxu0 0
      %1550 = vmatmul.mubr.bf16.gmra.mrb[0].mxu0 %v922
      %v1551 = vpop.f32.mrb[0].mxu0
      %v1552 = vadd.f32 0.0, %v1551
      %v1553 = vpop.f32.mrb[0].mxu0
      %v1554 = vpop.f32.mrb[0].mxu0
      %v1555 = vadd.f32 0.0, %v1554
      %v1556 = vpop.f32.mrb[0].mxu0
      %1557 = vmatprep.mubr.bf16.mxu0 0
      %1558 = vmatmul.mubr.bf16.gmra.mrb[0].mxu0 %v925
      %v1559 = vpop.f32.mrb[0].mxu0
      %v1560 = vadd.f32 0.0, %v1559
      %v1561 = vpop.f32.mrb[0].mxu0
      %v1562 = vpop.f32.mrb[0].mxu0
      %v1563 = vadd.f32 0.0, %v1562
      %v1564 = vpop.f32.mrb[0].mxu0
      %1565 = vmatprep.mubr.bf16.mxu0 0
      %1566 = vmatmul.mubr.bf16.gmra.mrb[0].mxu0 %v928
      %v1567 = vpop.f32.mrb[0].mxu0
      %v1568 = vadd.f32 0.0, %v1567
      %v1569 = vpop.f32.mrb[0].mxu0
      %v1570 = vpop.f32.mrb[0].mxu0
      %v1571 = vadd.f32 0.0, %v1570
      %v1572 = vpop.f32.mrb[0].mxu0
      %1573 = vmatprep.mubr.bf16.mxu0 0
      %1574 = vmatmul.mubr.bf16.gmra.mrb[0].mxu0 %v931
      %v1575 = vpop.f32.mrb[0].mxu0
      %v1576 = vadd.f32 0.0, %v1575
      %v1577 = vpop.f32.mrb[0].mxu0
      %v1578 = vpop.f32.mrb[0].mxu0
      %v1579 = vadd.f32 0.0, %v1578
      %v1580 = vpop.f32.mrb[0].mxu0
      %1581 = vdwg.mxu0
      %v1583 = vsel %vm920, %v1508, 0
      %v1586 = vsel %vm920, %v1509, 0
      %v1589 = vsel %vm920, %v1510, 0
      %v1592 = vsel %vm920, %v1511, 0
      %v1595 = vsel %vm933, %v1512, 0
      %1597 = vmatprep.subr.bf16.mxu0 0
      %1598 = vmatpush1.bf16.msra.mxu0 %v1595
      %1599 = vmatprep.subr.bf16.mxu0 0
      %1600 = vmatpush1.bf16.msra.mxu0 0
      %1601 = vmatprep.subr.bf16.mxu0 0
      %1602 = vmatpush1.bf16.msra.mxu0 0
      %1603 = vmatprep.subr.bf16.mxu0 0
      %1604 = vmatpush1.bf16.msra.mxu0 0
      %1605 = vmatprep.subr.bf16.mxu0 0
      %1606 = vmatpush1.bf16.msra.mxu0 0
      %1607 = vmatprep.subr.bf16.mxu0 0
      %1608 = vmatpush1.bf16.msra.mxu0 0
      %1609 = vmatprep.subr.bf16.mxu0 0
      %1610 = vmatpush1.bf16.msra.mxu0 0
      %1611 = vmatprep.subr.bf16.mxu0 0
      %1612 = vmatpush1.bf16.msra.mxu0 0
      %1613 = vmatprep.subr.bf16.mxu0 0
      %1614 = vmatpush1.bf16.msra.mxu0 0
      %1615 = vmatprep.subr.bf16.mxu0 0
      %1616 = vmatpush1.bf16.msra.mxu0 0
      %1617 = vmatprep.subr.bf16.mxu0 0
      %1618 = vmatpush1.bf16.msra.mxu0 0
      %1619 = vmatprep.subr.bf16.mxu0 0
      %1620 = vmatpush1.bf16.msra.mxu0 0
      %1621 = vmatprep.subr.bf16.mxu0 0
      %1622 = vmatpush1.bf16.msra.mxu0 0
      %1623 = vmatprep.subr.bf16.mxu0 0
      %1624 = vmatpush1.bf16.msra.mxu0 0
      %1625 = vmatprep.subr.bf16.mxu0 0
      %1626 = vmatpush1.bf16.msra.mxu0 0
      %1627 = vmatprep.subr.bf16.mxu0 0
      %1628 = vmatpush1.bf16.msra.mxu0 0
      %1629 = vmatprep.mubr.bf16.mxu0 0
      %1630 = vmatmul.mubr.bf16.gmra.mrb[0].mxu0 %v1583
      %v1631 = vpop.f32.mrb[0].mxu0
      %v1632 = vadd.f32 %v1552, %v1631
      %v1633 = vpop.f32.mrb[0].mxu0
      %v1634 = vpop.f32.mrb[0].mxu0
      %v1635 = vadd.f32 %v1555, %v1634
      %v1636 = vpop.f32.mrb[0].mxu0
      %1637 = vmatprep.mubr.bf16.mxu0 0
      %1638 = vmatmul.mubr.bf16.gmra.mrb[0].mxu0 %v1586
      %v1639 = vpop.f32.mrb[0].mxu0
      %v1640 = vadd.f32 %v1560, %v1639
      %v1641 = vpop.f32.mrb[0].mxu0
      %v1642 = vpop.f32.mrb[0].mxu0
      %v1643 = vadd.f32 %v1563, %v1642
      %v1644 = vpop.f32.mrb[0].mxu0
      %1645 = vmatprep.mubr.bf16.mxu0 0
      %1646 = vmatmul.mubr.bf16.gmra.mrb[0].mxu0 %v1589
      %v1647 = vpop.f32.mrb[0].mxu0
      %v1648 = vadd.f32 %v1568, %v1647
      %v1649 = vpop.f32.mrb[0].mxu0
      %v1650 = vpop.f32.mrb[0].mxu0
      %v1651 = vadd.f32 %v1571, %v1650
      %v1652 = vpop.f32.mrb[0].mxu0
      %1653 = vmatprep.mubr.bf16.mxu0 0
      %1654 = vmatmul.mubr.bf16.gmra.mrb[0].mxu0 %v1592
      %v1655 = vpop.f32.mrb[0].mxu0
      %v1656 = vadd.f32 %v1576, %v1655
      %v1657 = vpop.f32.mrb[0].mxu0
      %v1658 = vpop.f32.mrb[0].mxu0
      %v1659 = vadd.f32 %v1579, %v1658
      %v1660 = vpop.f32.mrb[0].mxu0
      %1661 = vdwg.mxu0
      %v1662 = vld [vmem:[%s18] sm:$0x1]
      %v1664 = vlaneseq
      %v1665 = vshrl.u32 %v1664, 7
      %v1666 = vsub.s32 0, %v1665
      %v1667 = vrot.slane %v1662, %v1666
      %v1669 = vadd.f32 %v1632, %v1667
      %v1670 = vadd.f32 %v1635, %v1667
      %v1671 = vadd.f32 %v1640, %v1667
      %v1672 = vadd.f32 %v1643, %v1667
      %v1673 = vadd.f32 %v1648, %v1667
      %v1674 = vadd.f32 %v1651, %v1667
      %v1675 = vadd.f32 %v1656, %v1667
      %v1676 = vadd.f32 %v1659, %v1667
      %v1677 = vmax.f32 %v1669, 0.0
      %v1678 = vmax.f32 %v1670, 0.0
      %v1679 = vmax.f32 %v1671, 0.0
      %v1680 = vmax.f32 %v1672, 0.0
      %v1681 = vmax.f32 %v1673, 0.0
      %v1682 = vmax.f32 %v1674, 0.0
      %v1683 = vmax.f32 %v1675, 0.0
      %v1684 = vmax.f32 %v1676, 0.0
      %vm1685 = vcmask 130048
      %1686 = vst.msk [vmem:[%s688] sm:$0xff] %vm1685, %v1677
      %1687 = vst.msk [vmem:[%s688 + $0x8] sm:$0xff] %vm1685, %v1678
      %1688 = vst.msk [vmem:[%s688 + $0x10] sm:$0xff] %vm1685, %v1679
      %1689 = vst.msk [vmem:[%s688 + $0x18] sm:$0xff] %vm1685, %v1680
      %1690 = vst.msk [vmem:[%s688 + $0x20] sm:$0xff] %vm1685, %v1681
      %1691 = vst.msk [vmem:[%s688 + $0x28] sm:$0xff] %vm1685, %v1682
      %1692 = vst.msk [vmem:[%s688 + $0x30] sm:$0xff] %vm1685, %v1683
      %1693 = vst.msk [vmem:[%s688 + $0x38] sm:$0xff] %vm1685, %v1684
      %s1694 = smul.u32 8, %s35
      %p1695 = scmp.lt.s32.totalorder %s34, 1
      %s1696 = scalar_select %p1695, %s34, 1
      %p1697 = scmp.lt.s32.totalorder %s1694, 31
      %s1698 = scalar_select %p1697, %s1694, 31
      %s1699 = smul.addr %s1696, 32
      %s1700 = sadd.s32 %s1698, %s1699
      %s1701 = smul.addr %s1700, 8
      %s1702 = scalar_lea.vmem %s19, %s1701
      // Predicated region
      $region101: #{tpu_custom_call.1} parent=95 // pred_check
        %p1703 = pneg %p483
      $region102: #{tpu_custom_call.1} parent=95 // pred_check_branch
        %1705 = sbr.rel (%p1703) target = $region104
      $region103: #{tpu_custom_call.1} parent=95 // pred_region
        %s1706 = smul.u32 8, %s35
      $region104: #{tpu_custom_call.1} parent=95 // pred_fallthru
        _
    $region96: #{tpu_custom_call.1} parent=5 // pred_fallthru
      _
    %p1707 = scmp.le.s32.totalorder 2, %s25
    // Predicated region
    $region105: #{tpu_custom_call.1} parent=5 // pred_check
      %p1708 = pneg %p1707
    $region106: #{tpu_custom_call.1} parent=5 // pred_check_branch
      %1710 = sbr.rel (%p1708) target = $region108
    $region107: #{tpu_custom_call.1} parent=5 // pred_region
      %s1711 = ssub.s32 %s25, 2
      // Predicated region
      $region109: #{tpu_custom_call.1} parent=107 // pred_check
        %p1712 = pneg %p489
      $region110: #{tpu_custom_call.1} parent=107 // pred_check_branch
        %1714 = sbr.rel (%p1712) target = $region112
      $region111: #{tpu_custom_call.1} parent=107 // pred_region
        %s1715 = smul.u32 8, %s37
        %p1716 = scmp.lt.s32.totalorder %s36, 1
        %s1717 = scalar_select %p1716, %s36, 1
        %p1718 = scmp.lt.s32.totalorder %s1715, 31
        %s1719 = scalar_select %p1718, %s1715, 31
        %s1720 = smul.addr %s1717, 32
        %s1721 = sadd.s32 %s1719, %s1720
        %s1722 = smul.addr %s1721, 8
        %s1723 = scalar_lea.vmem %s19, %s1722
      $region112: #{tpu_custom_call.1} parent=107 // pred_fallthru
        _
    $region108: #{tpu_custom_call.1} parent=5 // pred_fallthru
      _
  $region6: #{tpu_custom_call.1} parent=0 // loop_footer
    %s29 = sadd.s32 1, %s25
  $region7: #{tpu_custom_call.1} parent=0 // loop_footer_branch
    %24 = sbr.rel target = $region3
  $region8: #{tpu_custom_call.1} parent=0 // loop_exit
    _

</llo_original>
